<compile_context>
chip_gen: v6e
topology: v6e:2x2x1
jax: 0.10.0
libtpu: 0.0.40
codegen_flags: <defaults>
</compile_context>

<pallas_src>
import jax
import jax.numpy as jnp
from jax import lax
from jax.experimental import pallas as pl
from jax.experimental.pallas import tpu as pltpu


def _round_up(x, m):
    return ((x + m - 1) // m) * m


def _choose_chunk(T, B, requested, sublane=8):
    """Pick a time-chunk Tc so the (Tc*B, E) x block is sublane-aligned.
    (For best MXU fill, prefer Tc*B >= 128/256 when T and VMEM allow.)"""
    Tc = max(1, min(requested, T))
    while (Tc * B) % sublane != 0:
        Tc += 1
    return Tc


def lstm_chunk_kernel(x_ref, ntok_ref, b_ref, bout_ref,        # pipelined inputs
                      wih_hbm, whh_hbm, wout_hbm,              # ANY-space (HBM) weights
                      out_ref,                                  # output
                      wih_sc, whh_sc, wout_sc, dma_sem,         # resident weight scratch
                      xg_sc, h_sc, c_sc, sel_sc):               # state scratch
    """One grid step == one chunk of Tc LSTM timesteps."""
    chunk = pl.program_id(0)
    Bp, H = h_sc.shape
    Tc = x_ref.shape[0] // Bp

    @pl.when(chunk == 0)
    def _init():
        # Single-buffered resident weights: one DMA per pallas_call, reused every chunk.
        cps = [pltpu.make_async_copy(wih_hbm, wih_sc, dma_sem.at[0]),
               pltpu.make_async_copy(whh_hbm, whh_sc, dma_sem.at[1]),
               pltpu.make_async_copy(wout_hbm, wout_sc, dma_sem.at[2])]
        for cp in cps:
            cp.start()
        h_sc[...] = jnp.zeros_like(h_sc)
        c_sc[...] = jnp.zeros_like(c_sc)
        sel_sc[...] = jnp.zeros_like(sel_sc)
        for cp in cps:
            cp.wait()

    # Hoisted chunk-wide input projection (M = Tc*Bp rows), f32 accumulation, staged in
    # VMEM so the serial loop below only slices one (Bp, Gw) slab per step.
    xg_sc[...] = (jnp.dot(x_ref[...], wih_sc[...],
                          preferred_element_type=jnp.float32) + b_ref[...])

    whh = whh_sc[...]                       # hoist resident recurrent weight load
    ntok = ntok_ref[...]                    # (Bp, 1) int32
    base = chunk * Tc

    def step(t, carry):
        h, c, sel = carry
        row = pl.multiple_of(t * Bp, Bp)    # Bp is a multiple of 8 -> aligned dynamic slice
        gates = xg_sc[pl.ds(row, Bp), :] + jnp.dot(
            h.astype(whh.dtype), whh, preferred_element_type=jnp.float32)   # (Bp, Gw)
        # Gate k lives at lanes [k*H, (k+1)*H)  (PyTorch order i, f, g, o).
        if 4 * H <= 128:
            sig = jax.nn.sigmoid(gates)     # all sigmoid gates fit one vreg: single EUP pass
            i_g, f_g, o_g = sig[:, 0:H], sig[:, H:2 * H], sig[:, 3 * H:4 * H]
        else:
            i_g = jax.nn.sigmoid(gates[:, 0 * H:1 * H])
            f_g = jax.nn.sigmoid(gates[:, 1 * H:2 * H])
            o_g = jax.nn.sigmoid(gates[:, 3 * H:4 * H])
        g_g = jnp.tanh(gates[:, 2 * H:3 * H])
        c = f_g * c + i_g * g_g
        h = o_g * jnp.tanh(c)
        # Select h at timestep n_tokens-1 per row (== x[range(B), n_tokens-1, :]).
        sel = jnp.where((ntok - 1) == base + t, h, sel)
        return h, c, sel

    # fori_loop(unroll=True): full scheduling visibility across the chunk while bounding
    # vreg live ranges (lets Tc grow without spills).
    h, c, sel = lax.fori_loop(0, Tc, step,
                              (h_sc[...], c_sc[...], sel_sc[...]), unroll=True)
    h_sc[...] = h
    c_sc[...] = c
    sel_sc[...] = sel

    # Correct only because the grid is sequential ("arbitrary") and out_specs uses a
    # constant index_map (single writeback at the end of the grid).
    @pl.when(chunk == pl.num_programs(0) - 1)
    def _finalize():
        out_ref[...] = (jnp.dot(sel.astype(wout_sc.dtype), wout_sc[...],
                                preferred_element_type=jnp.float32)
                        + bout_ref[...]).astype(out_ref.dtype)


def init_params(key, num_embeddings, E, H, O):
    """PyTorch-layout parameters."""
    k = jax.random.split(key, 6)
    emb = jax.random.normal(k[0], (num_embeddings, E), jnp.float32) * 0.1
    emb = emb.at[0].set(0.0)                               # padding_idx=0 row is zero
    w_ih = jax.random.normal(k[1], (4 * H, E), jnp.float32) * 0.1
    w_hh = jax.random.normal(k[2], (4 * H, H), jnp.float32) * 0.1
    b_ih = jax.random.normal(k[3], (4 * H,), jnp.float32) * 0.1
    b_hh = jax.random.normal(k[4], (4 * H,), jnp.float32) * 0.1
    w_out = jax.random.normal(k[5], (O, H), jnp.float32) * 0.1
    b_out = jnp.zeros((O,), jnp.float32)
    return dict(emb=emb, w_ih=w_ih, w_hh=w_hh, b_ih=b_ih, b_hh=b_hh,
                w_out=w_out, b_out=b_out)


def prepare_params(p, compute_dtype=jnp.bfloat16):
    """Transpose to (in, out) layout, fold the two LSTM biases, and pad only the packed
    gate / output LANE dimension to a multiple of 128.

    Gate k (PyTorch order i, f, g, o) occupies columns [k*H, (k+1)*H) of the packed
    (., Gw) weight.  When H % 128 == 0 this equals per-gate 128-padding; when H < 128 it
    avoids the (128/H)^2 recurrent-FLOP and 4x EUP blow-up.  Padded columns are zero and
    never read back, so results are exact.  Biases stay f32 (added after accumulation).
    """
    E = p["w_ih"].shape[1]
    H = p["w_hh"].shape[1]
    O = p["w_out"].shape[0]
    Gw = _round_up(4 * H, 128)
    Op = _round_up(O, 128)

    wih_p = jnp.zeros((E, Gw), jnp.float32).at[:, :4 * H].set(p["w_ih"].T)
    whh_p = jnp.zeros((H, Gw), jnp.float32).at[:, :4 * H].set(p["w_hh"].T)
    b_p = jnp.zeros((1, Gw), jnp.float32).at[0, :4 * H].set(p["b_ih"] + p["b_hh"])
    wout_p = jnp.zeros((H, Op), jnp.float32).at[:, :O].set(p["w_out"].T)
    bout_p = jnp.zeros((1, Op), jnp.float32).at[0, :O].set(p["b_out"])

    return (p["emb"].astype(compute_dtype),
            wih_p.astype(compute_dtype),
            whh_p.astype(compute_dtype),
            b_p,
            wout_p.astype(compute_dtype),
            bout_p,
            H, Gw, O, Op)


def rnn_forward(x_ids, n_tokens, prepared, time_chunk=8):
    emb, wih_p, whh_p, b_p, wout_p, bout_p, H, Gw, O, Op = prepared
    B, T = x_ids.shape
    E = emb.shape[1]
    cdt = emb.dtype

    if n_tokens is None:                       # x[:, -1, :] default path
        n_tokens = jnp.full((B,), T, dtype=jnp.int32)
    # PyTorch would raise for out-of-range lengths; we clamp to [1, T] instead.
    ntok = jnp.clip(n_tokens.astype(jnp.int32), 1, T)

    # Pad batch to a sublane multiple: unmasked stores for h/c/gates/out on every step.
    Bp = _round_up(max(B, 8), 8)
    if Bp != B:
        x_ids = jnp.pad(x_ids, ((0, Bp - B), (0, 0)))      # id 0 -> zero embedding row
        ntok = jnp.concatenate([ntok, jnp.ones((Bp - B,), jnp.int32)])
    ntok = ntok.reshape(Bp, 1)

    # Embedding gather emitted directly time-major in the compute dtype (bf16 halves the
    # gathered-activation HBM traffic); no (B,T,E) activation transpose.
    x_tbe = jnp.take(emb, x_ids.T, axis=0)                 # (T, Bp, E)

    sublane = 16 if jnp.dtype(cdt) == jnp.dtype(jnp.bfloat16) else 8
    Tc = _choose_chunk(T, Bp, time_chunk, sublane)
    T_pad = _round_up(T, Tc)
    if T_pad != T:
        x_tbe = jnp.pad(x_tbe, ((0, T_pad - T), (0, 0), (0, 0)))
    x2d = x_tbe.reshape(T_pad * Bp, E)        # chunk c rows: [c*Tc*Bp, (c+1)*Tc*Bp)
    n_chunks = T_pad // Tc

    # Explicit VMEM budget (default scoped limit is 16/32 MiB; v7x physical is 64 MiB).
    ew = jnp.dtype(cdt).itemsize

    def padded(r, c, itemsize):
        return _round_up(r, 8) * _round_up(c, 128) * itemsize

    est = (2 * padded(Tc * Bp, E, ew)                                    # x (double-buffered)
           + padded(E, Gw, ew) + padded(H, Gw, ew) + padded(H, Op, ew)   # resident weights
           + padded(Tc * Bp, Gw, 4)                                      # staged projection
           + 3 * padded(Bp, H, 4)                                        # h / c / selected-h
           + 2 * (padded(Bp, Op, 4) + padded(Bp, 1, 4)
                  + padded(1, Gw, 4) + padded(1, Op, 4)))                # out, ntok, biases
    vmem_limit = int(min(64 << 20, max(32 << 20, 2 * est)))

    out = pl.pallas_call(
        lstm_chunk_kernel,
        out_shape=jax.ShapeDtypeStruct((Bp, Op), jnp.float32),
        grid_spec=pltpu.PrefetchScalarGridSpec(
            num_scalar_prefetch=0,
            grid=(n_chunks,),
            in_specs=[
                pl.BlockSpec((Tc * Bp, E), lambda c: (c, 0)),   # x chunk (time-major, 2D)
                pl.BlockSpec((Bp, 1), lambda c: (0, 0)),        # n_tokens
                pl.BlockSpec((1, Gw), lambda c: (0, 0)),        # folded LSTM bias (f32)
                pl.BlockSpec((1, Op), lambda c: (0, 0)),        # output bias (f32)
                pl.BlockSpec(memory_space=pl.ANY),              # W_ih^T  (DMA'd once)
                pl.BlockSpec(memory_space=pl.ANY),              # W_hh^T  (DMA'd once)
                pl.BlockSpec(memory_space=pl.ANY),              # W_out^T (DMA'd once)
            ],
            out_specs=pl.BlockSpec((Bp, Op), lambda c: (0, 0)),
            scratch_shapes=[
                pltpu.VMEM((E, Gw), cdt),                   # resident W_ih^T
                pltpu.VMEM((H, Gw), cdt),                   # resident W_hh^T
                pltpu.VMEM((H, Op), cdt),                   # resident W_out^T
                pltpu.SemaphoreType.DMA((3,)),
                pltpu.VMEM((Tc * Bp, Gw), jnp.float32),     # staged input projection
                pltpu.VMEM((Bp, H), jnp.float32),           # h
                pltpu.VMEM((Bp, H), jnp.float32),           # c
                pltpu.VMEM((Bp, H), jnp.float32),           # selected h
            ],
        ),
        compiler_params=pltpu.CompilerParams(
            dimension_semantics=("arbitrary",),             # sequential recurrence
            vmem_limit_bytes=vmem_limit),
    )(x2d, ntok, b_p, bout_p, wih_p, whh_p, wout_p)

    return out[:B, :O]


def ref_forward(x_ids, n_tokens, p):
    """Pure-JAX reference (PyTorch LSTM semantics) for correctness checking."""
    emb, w_out, b_out = p["emb"], p["w_out"], p["b_out"]
    H = p["w_hh"].shape[1]
    B, T = x_ids.shape
    wih_t, whh_t = p["w_ih"].T, p["w_hh"].T
    b = p["b_ih"] + p["b_hh"]
    x_emb = jnp.take(emb, x_ids, axis=0)

    def step(carry, x_t):
        h, c = carry
        g = x_t @ wih_t + h @ whh_t + b
        i = jax.nn.sigmoid(g[:, :H])
        f = jax.nn.sigmoid(g[:, H:2 * H])
        gg = jnp.tanh(g[:, 2 * H:3 * H])
        o = jax.nn.sigmoid(g[:, 3 * H:])
        c = f * c + i * gg
        h = o * jnp.tanh(c)
        return (h, c), h

    h0 = jnp.zeros((B, H), jnp.float32)
    (_, _), hs = lax.scan(step, (h0, h0), jnp.transpose(x_emb, (1, 0, 2)))
    sel = jnp.transpose(hs, (1, 0, 2))[jnp.arange(B), n_tokens - 1]
    return sel @ w_out.T + b_out[None, :]


if __name__ == "__main__":
    B, T = 2, 8
    num_embeddings, E, H, O = 100, 32, 32, 1

    key = jax.random.PRNGKey(0)
    pk, xk = jax.random.split(key)
    params = init_params(pk, num_embeddings, E, H, O)

    x_ids = jax.random.randint(xk, (B, T), 1, num_embeddings)
    n_tokens = jnp.array([T, 5], dtype=jnp.int32)          # second sequence is shorter
    x_ids = x_ids.at[1, 5:].set(0)                         # pad past its length with index 0

    ref = ref_forward(x_ids, n_tokens, params)

    # f32 path: exact vs the reference; exercise both multi-chunk and single-chunk grids.
    prepared_f32 = prepare_params(params, compute_dtype=jnp.float32)
    for tc in (4, 8):
        out = jax.block_until_ready(rnn_forward(x_ids, n_tokens, prepared_f32, time_chunk=tc))
        assert out.shape == (B, O)
        assert jnp.allclose(out, ref, atol=1e-5, rtol=1e-5), (tc, out, ref)

    # bf16 weights/activations (default production path): f32 accumulation, state and
    # gate math; compare against the f32 reference at a looser tolerance.
    prepared_bf16 = prepare_params(params, compute_dtype=jnp.bfloat16)
    out_bf16 = jax.block_until_ready(rnn_forward(x_ids, n_tokens, prepared_bf16, time_chunk=8))
    assert out_bf16.shape == (B, O)
    assert jnp.allclose(out_bf16, ref, atol=3e-2, rtol=3e-2), (out_bf16, ref)

    print("KERNEL_OK")
</pallas_src>

<mosaic_0001>
module attributes {stable_mosaic.version = 11 : i64} {
  func.func @lstm_chunk_kernel(%arg0: i32, %arg1: memref<32x32xf32, #tpu.memory_space<vmem>>, %arg2: memref<8x1xi32, #tpu.memory_space<vmem>>, %arg3: memref<1x128xf32, #tpu.memory_space<vmem>>, %arg4: memref<1x128xf32, #tpu.memory_space<vmem>>, %arg5: memref<32x128xf32, #tpu.memory_space<any>>, %arg6: memref<32x128xf32, #tpu.memory_space<any>>, %arg7: memref<32x128xf32, #tpu.memory_space<any>>, %arg8: memref<8x128xf32, #tpu.memory_space<vmem>>, %arg9: memref<32x128xf32, #tpu.memory_space<vmem>>, %arg10: memref<32x128xf32, #tpu.memory_space<vmem>>, %arg11: memref<32x128xf32, #tpu.memory_space<vmem>>, %arg12: memref<3x!tpu.dma_semaphore, #tpu.memory_space<semaphore_mem>>, %arg13: memref<32x128xf32, #tpu.memory_space<vmem>>, %arg14: memref<8x32xf32, #tpu.memory_space<vmem>>, %arg15: memref<8x32xf32, #tpu.memory_space<vmem>>, %arg16: memref<8x32xf32, #tpu.memory_space<vmem>>) attributes {dimension_semantics = [#tpu.dimension_semantics<arbitrary>], iteration_bounds = array<i64: 2>, scalar_prefetch = 0 : i64, scratch_operands = 8 : i64, tpu.core_type = #tpu.core_type<tc>, window_params = [{transform_indices = @transform_0, window_bounds = array<i64: 32, 32>}, {pipeline_mode = #tpu.pipeline_mode<synchronous>, transform_indices = @transform_1, window_bounds = array<i64: 8, 1>}, {pipeline_mode = #tpu.pipeline_mode<synchronous>, transform_indices = @transform_2, window_bounds = array<i64: 1, 128>}, {pipeline_mode = #tpu.pipeline_mode<synchronous>, transform_indices = @transform_3, window_bounds = array<i64: 1, 128>}, {}, {}, {}, {pipeline_mode = #tpu.pipeline_mode<synchronous>, transform_indices = @transform_7, window_bounds = array<i64: 8, 128>}]} {
    %c0_i32 = arith.constant 0 : i32
    %0 = arith.cmpi eq, %arg0, %c0_i32 : i32
    %1 = arith.extui %0 : i1 to i32
    %c0_i32_0 = arith.constant 0 : i32
    %2 = arith.cmpi ne, %1, %c0_i32_0 : i32
    scf.if %2 {
      %c0_i32_47 = arith.constant 0 : i32
      %138 = tpu.memref_slice %arg12[%c0_i32_47] : memref<3x!tpu.dma_semaphore, #tpu.memory_space<semaphore_mem>> -> memref<1x!tpu.dma_semaphore, #tpu.memory_space<semaphore_mem>>
      %139 = tpu.memref_squeeze %138 : memref<1x!tpu.dma_semaphore, #tpu.memory_space<semaphore_mem>> -> memref<!tpu.dma_semaphore, #tpu.memory_space<semaphore_mem>>
      tpu.enqueue_dma source(%arg5 : memref<32x128xf32, #tpu.memory_space<any>>) target(%arg9 : memref<32x128xf32, #tpu.memory_space<vmem>>) target_semaphore(%139 : memref<!tpu.dma_semaphore, #tpu.memory_space<semaphore_mem>>)
      %c1_i32_48 = arith.constant 1 : i32
      %140 = tpu.memref_slice %arg12[%c1_i32_48] : memref<3x!tpu.dma_semaphore, #tpu.memory_space<semaphore_mem>> -> memref<1x!tpu.dma_semaphore, #tpu.memory_space<semaphore_mem>>
      %141 = tpu.memref_squeeze %140 : memref<1x!tpu.dma_semaphore, #tpu.memory_space<semaphore_mem>> -> memref<!tpu.dma_semaphore, #tpu.memory_space<semaphore_mem>>
      tpu.enqueue_dma source(%arg6 : memref<32x128xf32, #tpu.memory_space<any>>) target(%arg10 : memref<32x128xf32, #tpu.memory_space<vmem>>) target_semaphore(%141 : memref<!tpu.dma_semaphore, #tpu.memory_space<semaphore_mem>>)
      %c2_i32_49 = arith.constant 2 : i32
      %142 = tpu.memref_slice %arg12[%c2_i32_49] : memref<3x!tpu.dma_semaphore, #tpu.memory_space<semaphore_mem>> -> memref<1x!tpu.dma_semaphore, #tpu.memory_space<semaphore_mem>>
      %143 = tpu.memref_squeeze %142 : memref<1x!tpu.dma_semaphore, #tpu.memory_space<semaphore_mem>> -> memref<!tpu.dma_semaphore, #tpu.memory_space<semaphore_mem>>
      tpu.enqueue_dma source(%arg7 : memref<32x128xf32, #tpu.memory_space<any>>) target(%arg11 : memref<32x128xf32, #tpu.memory_space<vmem>>) target_semaphore(%143 : memref<!tpu.dma_semaphore, #tpu.memory_space<semaphore_mem>>)
      %cst_50 = arith.constant 0.000000e+00 : f32
      %144 = vector.broadcast %cst_50 : f32 to vector<8x32xf32>
      %c0_51 = arith.constant 0 : index
      %c0_52 = arith.constant 0 : index
      %145 = vector.load %arg14[%c0_51, %c0_52] : memref<8x32xf32, #tpu.memory_space<vmem>>, vector<8x32xf32>
      tpu.vector_store %arg14[%c0_51, %c0_52], %144 {strides = array<i32>} : memref<8x32xf32, #tpu.memory_space<vmem>>, vector<8x32xf32>,
      %cst_53 = arith.constant 0.000000e+00 : f32
      %146 = vector.broadcast %cst_53 : f32 to vector<8x32xf32>
      %c0_54 = arith.constant 0 : index
      %c0_55 = arith.constant 0 : index
      %147 = vector.load %arg15[%c0_54, %c0_55] : memref<8x32xf32, #tpu.memory_space<vmem>>, vector<8x32xf32>
      tpu.vector_store %arg15[%c0_54, %c0_55], %146 {strides = array<i32>} : memref<8x32xf32, #tpu.memory_space<vmem>>, vector<8x32xf32>,
      %cst_56 = arith.constant 0.000000e+00 : f32
      %148 = vector.broadcast %cst_56 : f32 to vector<8x32xf32>
      %c0_57 = arith.constant 0 : index
      %c0_58 = arith.constant 0 : index
      %149 = vector.load %arg16[%c0_57, %c0_58] : memref<8x32xf32, #tpu.memory_space<vmem>>, vector<8x32xf32>
      tpu.vector_store %arg16[%c0_57, %c0_58], %148 {strides = array<i32>} : memref<8x32xf32, #tpu.memory_space<vmem>>, vector<8x32xf32>,
      %c0_i32_59 = arith.constant 0 : i32
      %150 = tpu.memref_slice %arg12[%c0_i32_59] : memref<3x!tpu.dma_semaphore, #tpu.memory_space<semaphore_mem>> -> memref<1x!tpu.dma_semaphore, #tpu.memory_space<semaphore_mem>>
      %151 = tpu.memref_squeeze %150 : memref<1x!tpu.dma_semaphore, #tpu.memory_space<semaphore_mem>> -> memref<!tpu.dma_semaphore, #tpu.memory_space<semaphore_mem>>
      tpu.wait_dma2 semaphore(%151 : memref<!tpu.dma_semaphore, #tpu.memory_space<semaphore_mem>>) src(%arg5 : memref<32x128xf32, #tpu.memory_space<any>>) dst(%arg9 : memref<32x128xf32, #tpu.memory_space<vmem>>)
      %c1_i32_60 = arith.constant 1 : i32
      %152 = tpu.memref_slice %arg12[%c1_i32_60] : memref<3x!tpu.dma_semaphore, #tpu.memory_space<semaphore_mem>> -> memref<1x!tpu.dma_semaphore, #tpu.memory_space<semaphore_mem>>
      %153 = tpu.memref_squeeze %152 : memref<1x!tpu.dma_semaphore, #tpu.memory_space<semaphore_mem>> -> memref<!tpu.dma_semaphore, #tpu.memory_space<semaphore_mem>>
      tpu.wait_dma2 semaphore(%153 : memref<!tpu.dma_semaphore, #tpu.memory_space<semaphore_mem>>) src(%arg6 : memref<32x128xf32, #tpu.memory_space<any>>) dst(%arg10 : memref<32x128xf32, #tpu.memory_space<vmem>>)
      %c2_i32_61 = arith.constant 2 : i32
      %154 = tpu.memref_slice %arg12[%c2_i32_61] : memref<3x!tpu.dma_semaphore, #tpu.memory_space<semaphore_mem>> -> memref<1x!tpu.dma_semaphore, #tpu.memory_space<semaphore_mem>>
      %155 = tpu.memref_squeeze %154 : memref<1x!tpu.dma_semaphore, #tpu.memory_space<semaphore_mem>> -> memref<!tpu.dma_semaphore, #tpu.memory_space<semaphore_mem>>
      tpu.wait_dma2 semaphore(%155 : memref<!tpu.dma_semaphore, #tpu.memory_space<semaphore_mem>>) src(%arg7 : memref<32x128xf32, #tpu.memory_space<any>>) dst(%arg11 : memref<32x128xf32, #tpu.memory_space<vmem>>)
    } else {
    }
    %c0 = arith.constant 0 : index
    %c0_1 = arith.constant 0 : index
    %3 = vector.load %arg1[%c0, %c0_1] : memref<32x32xf32, #tpu.memory_space<vmem>>, vector<32x32xf32>
    %c0_2 = arith.constant 0 : index
    %c0_3 = arith.constant 0 : index
    %4 = vector.load %arg9[%c0_2, %c0_3] : memref<32x128xf32, #tpu.memory_space<vmem>>, vector<32x128xf32>
    %cst = arith.constant dense<0.000000e+00> : vector<32x128xf32>
    %5 = tpu.matmul %3, %4, %cst {dimension_numbers = #tpu.dot_dimension_numbers<[1], [0], [0], [1], [0, 0, 1, 1], [], []>} : vector<32x32xf32>, vector<32x128xf32>, vector<32x128xf32> -> vector<32x128xf32>
    %c0_4 = arith.constant 0 : index
    %c0_5 = arith.constant 0 : index
    %6 = vector.load %arg3[%c0_4, %c0_5] : memref<1x128xf32, #tpu.memory_space<vmem>>, vector<1x128xf32>
    %7 = vector.broadcast %6 : vector<1x128xf32> to vector<32x128xf32>
    %8 = arith.addf %5, %7 : vector<32x128xf32>
    %c0_6 = arith.constant 0 : index
    %c0_7 = arith.constant 0 : index
    %9 = vector.load %arg13[%c0_6, %c0_7] : memref<32x128xf32, #tpu.memory_space<vmem>>, vector<32x128xf32>
    tpu.vector_store %arg13[%c0_6, %c0_7], %8 {strides = array<i32>} : memref<32x128xf32, #tpu.memory_space<vmem>>, vector<32x128xf32>,
    %c0_8 = arith.constant 0 : index
    %c0_9 = arith.constant 0 : index
    %10 = vector.load %arg10[%c0_8, %c0_9] : memref<32x128xf32, #tpu.memory_space<vmem>>, vector<32x128xf32>
    %c0_10 = arith.constant 0 : index
    %c0_11 = arith.constant 0 : index
    %11 = vector.load %arg2[%c0_10, %c0_11] : memref<8x1xi32, #tpu.memory_space<vmem>>, vector<8x1xi32>
    %c4_i32 = arith.constant 4 : i32
    %12 = arith.muli %arg0, %c4_i32 : i32
    %c0_12 = arith.constant 0 : index
    %c0_13 = arith.constant 0 : index
    %13 = vector.load %arg14[%c0_12, %c0_13] : memref<8x32xf32, #tpu.memory_space<vmem>>, vector<8x32xf32>
    %c0_14 = arith.constant 0 : index
    %c0_15 = arith.constant 0 : index
    %14 = vector.load %arg15[%c0_14, %c0_15] : memref<8x32xf32, #tpu.memory_space<vmem>>, vector<8x32xf32>
    %c0_16 = arith.constant 0 : index
    %c0_17 = arith.constant 0 : index
    %15 = vector.load %arg16[%c0_16, %c0_17] : memref<8x32xf32, #tpu.memory_space<vmem>>, vector<8x32xf32>
    %c0_i32_18 = arith.constant 0 : i32
    %c8_i32 = arith.constant 8 : i32
    %16 = arith.muli %c0_i32_18, %c8_i32 : i32
    %17 = tpu.assume_multiple %16, 8 : i32
    %18 = arith.index_cast %17 : i32 to index
    %c0_19 = arith.constant 0 : index
    %19 = vector.load %arg13[%18, %c0_19] : memref<32x128xf32, #tpu.memory_space<vmem>>, vector<8x128xf32>
    %cst_20 = arith.constant dense<0.000000e+00> : vector<8x128xf32>
    %20 = tpu.matmul %13, %10, %cst_20 {dimension_numbers = #tpu.dot_dimension_numbers<[1], [0], [0], [1], [0, 0, 1, 1], [], []>} : vector<8x32xf32>, vector<32x128xf32>, vector<8x128xf32> -> vector<8x128xf32>
    %21 = arith.addf %19, %20 : vector<8x128xf32>
    %22 = arith.negf %21 : vector<8x128xf32>
    %23 = math.exp %22 : vector<8x128xf32>
    %cst_21 = arith.constant 1.000000e+00 : f32
    %24 = vector.broadcast %cst_21 : f32 to vector<8x128xf32>
    %25 = arith.addf %24, %23 : vector<8x128xf32>
    %26 = arith.divf %24, %25 : vector<8x128xf32>
    %27 = vector.extract_strided_slice %26 {offsets = [0, 0], sizes = [8, 32], strides = [1, 1]} : vector<8x128xf32> to vector<8x32xf32>
    %28 = vector.extract_strided_slice %26 {offsets = [0, 32], sizes = [8, 32], strides = [1, 1]} : vector<8x128xf32> to vector<8x32xf32>
    %29 = vector.extract_strided_slice %26 {offsets = [0, 96], sizes = [8, 32], strides = [1, 1]} : vector<8x128xf32> to vector<8x32xf32>
    %30 = vector.extract_strided_slice %21 {offsets = [0, 64], sizes = [8, 32], strides = [1, 1]} : vector<8x128xf32> to vector<8x32xf32>
    %31 = math.tanh %30 : vector<8x32xf32>
    %32 = arith.mulf %28, %14 : vector<8x32xf32>
    %33 = arith.mulf %27, %31 : vector<8x32xf32>
    %34 = arith.addf %32, %33 : vector<8x32xf32>
    %35 = math.tanh %34 : vector<8x32xf32>
    %36 = arith.mulf %29, %35 : vector<8x32xf32>
    %c1_i32 = arith.constant 1 : i32
    %37 = vector.broadcast %c1_i32 : i32 to vector<8x1xi32>
    %38 = arith.subi %11, %37 : vector<8x1xi32>
    %39 = arith.addi %12, %c0_i32_18 : i32
    %40 = vector.broadcast %39 : i32 to vector<8x1xi32>
    %41 = arith.cmpi eq, %38, %40 : vector<8x1xi32>
    %42 = vector.shape_cast %41 : vector<8x1xi1> to vector<8x1xi1>
    %43 = vector.broadcast %42 : vector<8x1xi1> to vector<8x32xi1>
    %44 = arith.select %43, %36, %15 : vector<8x32xi1>, vector<8x32xf32>
    %c1_i32_22 = arith.constant 1 : i32
    %c8_i32_23 = arith.constant 8 : i32
    %45 = arith.muli %c1_i32_22, %c8_i32_23 : i32
    %46 = tpu.assume_multiple %45, 8 : i32
    %47 = arith.index_cast %46 : i32 to index
    %c0_24 = arith.constant 0 : index
    %48 = vector.load %arg13[%47, %c0_24] : memref<32x128xf32, #tpu.memory_space<vmem>>, vector<8x128xf32>
    %cst_25 = arith.constant dense<0.000000e+00> : vector<8x128xf32>
    %49 = tpu.matmul %36, %10, %cst_25 {dimension_numbers = #tpu.dot_dimension_numbers<[1], [0], [0], [1], [0, 0, 1, 1], [], []>} : vector<8x32xf32>, vector<32x128xf32>, vector<8x128xf32> -> vector<8x128xf32>
    %50 = arith.addf %48, %49 : vector<8x128xf32>
    %51 = arith.negf %50 : vector<8x128xf32>
    %52 = math.exp %51 : vector<8x128xf32>
    %cst_26 = arith.constant 1.000000e+00 : f32
    %53 = vector.broadcast %cst_26 : f32 to vector<8x128xf32>
    %54 = arith.addf %53, %52 : vector<8x128xf32>
    %55 = arith.divf %53, %54 : vector<8x128xf32>
    %56 = vector.extract_strided_slice %55 {offsets = [0, 0], sizes = [8, 32], strides = [1, 1]} : vector<8x128xf32> to vector<8x32xf32>
    %57 = vector.extract_strided_slice %55 {offsets = [0, 32], sizes = [8, 32], strides = [1, 1]} : vector<8x128xf32> to vector<8x32xf32>
    %58 = vector.extract_strided_slice %55 {offsets = [0, 96], sizes = [8, 32], strides = [1, 1]} : vector<8x128xf32> to vector<8x32xf32>
    %59 = vector.extract_strided_slice %50 {offsets = [0, 64], sizes = [8, 32], strides = [1, 1]} : vector<8x128xf32> to vector<8x32xf32>
    %60 = math.tanh %59 : vector<8x32xf32>
    %61 = arith.mulf %57, %34 : vector<8x32xf32>
    %62 = arith.mulf %56, %60 : vector<8x32xf32>
    %63 = arith.addf %61, %62 : vector<8x32xf32>
    %64 = math.tanh %63 : vector<8x32xf32>
    %65 = arith.mulf %58, %64 : vector<8x32xf32>
    %c1_i32_27 = arith.constant 1 : i32
    %66 = vector.broadcast %c1_i32_27 : i32 to vector<8x1xi32>
    %67 = arith.subi %11, %66 : vector<8x1xi32>
    %68 = arith.addi %12, %c1_i32_22 : i32
    %69 = vector.broadcast %68 : i32 to vector<8x1xi32>
    %70 = arith.cmpi eq, %67, %69 : vector<8x1xi32>
    %71 = vector.shape_cast %70 : vector<8x1xi1> to vector<8x1xi1>
    %72 = vector.broadcast %71 : vector<8x1xi1> to vector<8x32xi1>
    %73 = arith.select %72, %65, %44 : vector<8x32xi1>, vector<8x32xf32>
    %c2_i32 = arith.constant 2 : i32
    %c8_i32_28 = arith.constant 8 : i32
    %74 = arith.muli %c2_i32, %c8_i32_28 : i32
    %75 = tpu.assume_multiple %74, 8 : i32
    %76 = arith.index_cast %75 : i32 to index
    %c0_29 = arith.constant 0 : index
    %77 = vector.load %arg13[%76, %c0_29] : memref<32x128xf32, #tpu.memory_space<vmem>>, vector<8x128xf32>
    %cst_30 = arith.constant dense<0.000000e+00> : vector<8x128xf32>
    %78 = tpu.matmul %65, %10, %cst_30 {dimension_numbers = #tpu.dot_dimension_numbers<[1], [0], [0], [1], [0, 0, 1, 1], [], []>} : vector<8x32xf32>, vector<32x128xf32>, vector<8x128xf32> -> vector<8x128xf32>
    %79 = arith.addf %77, %78 : vector<8x128xf32>
    %80 = arith.negf %79 : vector<8x128xf32>
    %81 = math.exp %80 : vector<8x128xf32>
    %cst_31 = arith.constant 1.000000e+00 : f32
    %82 = vector.broadcast %cst_31 : f32 to vector<8x128xf32>
    %83 = arith.addf %82, %81 : vector<8x128xf32>
    %84 = arith.divf %82, %83 : vector<8x128xf32>
    %85 = vector.extract_strided_slice %84 {offsets = [0, 0], sizes = [8, 32], strides = [1, 1]} : vector<8x128xf32> to vector<8x32xf32>
    %86 = vector.extract_strided_slice %84 {offsets = [0, 32], sizes = [8, 32], strides = [1, 1]} : vector<8x128xf32> to vector<8x32xf32>
    %87 = vector.extract_strided_slice %84 {offsets = [0, 96], sizes = [8, 32], strides = [1, 1]} : vector<8x128xf32> to vector<8x32xf32>
    %88 = vector.extract_strided_slice %79 {offsets = [0, 64], sizes = [8, 32], strides = [1, 1]} : vector<8x128xf32> to vector<8x32xf32>
    %89 = math.tanh %88 : vector<8x32xf32>
    %90 = arith.mulf %86, %63 : vector<8x32xf32>
    %91 = arith.mulf %85, %89 : vector<8x32xf32>
    %92 = arith.addf %90, %91 : vector<8x32xf32>
    %93 = math.tanh %92 : vector<8x32xf32>
    %94 = arith.mulf %87, %93 : vector<8x32xf32>
    %c1_i32_32 = arith.constant 1 : i32
    %95 = vector.broadcast %c1_i32_32 : i32 to vector<8x1xi32>
    %96 = arith.subi %11, %95 : vector<8x1xi32>
    %97 = arith.addi %12, %c2_i32 : i32
    %98 = vector.broadcast %97 : i32 to vector<8x1xi32>
    %99 = arith.cmpi eq, %96, %98 : vector<8x1xi32>
    %100 = vector.shape_cast %99 : vector<8x1xi1> to vector<8x1xi1>
    %101 = vector.broadcast %100 : vector<8x1xi1> to vector<8x32xi1>
    %102 = arith.select %101, %94, %73 : vector<8x32xi1>, vector<8x32xf32>
    %c3_i32 = arith.constant 3 : i32
    %c8_i32_33 = arith.constant 8 : i32
    %103 = arith.muli %c3_i32, %c8_i32_33 : i32
    %104 = tpu.assume_multiple %103, 8 : i32
    %105 = arith.index_cast %104 : i32 to index
    %c0_34 = arith.constant 0 : index
    %106 = vector.load %arg13[%105, %c0_34] : memref<32x128xf32, #tpu.memory_space<vmem>>, vector<8x128xf32>
    %cst_35 = arith.constant dense<0.000000e+00> : vector<8x128xf32>
    %107 = tpu.matmul %94, %10, %cst_35 {dimension_numbers = #tpu.dot_dimension_numbers<[1], [0], [0], [1], [0, 0, 1, 1], [], []>} : vector<8x32xf32>, vector<32x128xf32>, vector<8x128xf32> -> vector<8x128xf32>
    %108 = arith.addf %106, %107 : vector<8x128xf32>
    %109 = arith.negf %108 : vector<8x128xf32>
    %110 = math.exp %109 : vector<8x128xf32>
    %cst_36 = arith.constant 1.000000e+00 : f32
    %111 = vector.broadcast %cst_36 : f32 to vector<8x128xf32>
    %112 = arith.addf %111, %110 : vector<8x128xf32>
    %113 = arith.divf %111, %112 : vector<8x128xf32>
    %114 = vector.extract_strided_slice %113 {offsets = [0, 0], sizes = [8, 32], strides = [1, 1]} : vector<8x128xf32> to vector<8x32xf32>
    %115 = vector.extract_strided_slice %113 {offsets = [0, 32], sizes = [8, 32], strides = [1, 1]} : vector<8x128xf32> to vector<8x32xf32>
    %116 = vector.extract_strided_slice %113 {offsets = [0, 96], sizes = [8, 32], strides = [1, 1]} : vector<8x128xf32> to vector<8x32xf32>
    %117 = vector.extract_strided_slice %108 {offsets = [0, 64], sizes = [8, 32], strides = [1, 1]} : vector<8x128xf32> to vector<8x32xf32>
    %118 = math.tanh %117 : vector<8x32xf32>
    %119 = arith.mulf %115, %92 : vector<8x32xf32>
    %120 = arith.mulf %114, %118 : vector<8x32xf32>
    %121 = arith.addf %119, %120 : vector<8x32xf32>
    %122 = math.tanh %121 : vector<8x32xf32>
    %123 = arith.mulf %116, %122 : vector<8x32xf32>
    %c1_i32_37 = arith.constant 1 : i32
    %124 = vector.broadcast %c1_i32_37 : i32 to vector<8x1xi32>
    %125 = arith.subi %11, %124 : vector<8x1xi32>
    %126 = arith.addi %12, %c3_i32 : i32
    %127 = vector.broadcast %126 : i32 to vector<8x1xi32>
    %128 = arith.cmpi eq, %125, %127 : vector<8x1xi32>
    %129 = vector.shape_cast %128 : vector<8x1xi1> to vector<8x1xi1>
    %130 = vector.broadcast %129 : vector<8x1xi1> to vector<8x32xi1>
    %131 = arith.select %130, %123, %102 : vector<8x32xi1>, vector<8x32xf32>
    %c4_i32_38 = arith.constant 4 : i32
    %c0_39 = arith.constant 0 : index
    %c0_40 = arith.constant 0 : index
    %132 = vector.load %arg14[%c0_39, %c0_40] : memref<8x32xf32, #tpu.memory_space<vmem>>, vector<8x32xf32>
    tpu.vector_store %arg14[%c0_39, %c0_40], %123 {strides = array<i32>} : memref<8x32xf32, #tpu.memory_space<vmem>>, vector<8x32xf32>,
    %c0_41 = arith.constant 0 : index
    %c0_42 = arith.constant 0 : index
    %133 = vector.load %arg15[%c0_41, %c0_42] : memref<8x32xf32, #tpu.memory_space<vmem>>, vector<8x32xf32>
    tpu.vector_store %arg15[%c0_41, %c0_42], %121 {strides = array<i32>} : memref<8x32xf32, #tpu.memory_space<vmem>>, vector<8x32xf32>,
    %c0_43 = arith.constant 0 : index
    %c0_44 = arith.constant 0 : index
    %134 = vector.load %arg16[%c0_43, %c0_44] : memref<8x32xf32, #tpu.memory_space<vmem>>, vector<8x32xf32>
    tpu.vector_store %arg16[%c0_43, %c0_44], %131 {strides = array<i32>} : memref<8x32xf32, #tpu.memory_space<vmem>>, vector<8x32xf32>,
    %c1_i32_45 = arith.constant 1 : i32
    %135 = arith.cmpi eq, %arg0, %c1_i32_45 : i32
    %136 = arith.extui %135 : i1 to i32
    %c0_i32_46 = arith.constant 0 : i32
    %137 = arith.cmpi ne, %136, %c0_i32_46 : i32
    scf.if %137 {
      %c0_47 = arith.constant 0 : index
      %c0_48 = arith.constant 0 : index
      %138 = vector.load %arg11[%c0_47, %c0_48] : memref<32x128xf32, #tpu.memory_space<vmem>>, vector<32x128xf32>
      %cst_49 = arith.constant dense<0.000000e+00> : vector<8x128xf32>
      %139 = tpu.matmul %131, %138, %cst_49 {dimension_numbers = #tpu.dot_dimension_numbers<[1], [0], [0], [1], [0, 0, 1, 1], [], []>} : vector<8x32xf32>, vector<32x128xf32>, vector<8x128xf32> -> vector<8x128xf32>
      %c0_50 = arith.constant 0 : index
      %c0_51 = arith.constant 0 : index
      %140 = vector.load %arg4[%c0_50, %c0_51] : memref<1x128xf32, #tpu.memory_space<vmem>>, vector<1x128xf32>
      %141 = vector.broadcast %140 : vector<1x128xf32> to vector<8x128xf32>
      %142 = arith.addf %139, %141 : vector<8x128xf32>
      %c0_52 = arith.constant 0 : index
      %c0_53 = arith.constant 0 : index
      %143 = vector.load %arg8[%c0_52, %c0_53] : memref<8x128xf32, #tpu.memory_space<vmem>>, vector<8x128xf32>
      tpu.vector_store %arg8[%c0_52, %c0_53], %142 {strides = array<i32>} : memref<8x128xf32, #tpu.memory_space<vmem>>, vector<8x128xf32>,
    } else {
    }
    return
  }
  func.func @transform_0(%arg0: i32) -> (i32, i32) {
    %c0_i32 = arith.constant 0 : i32
    %c0_i32_0 = arith.constant 0 : i32
    return %arg0, %c0_i32 : i32, i32
  }
  func.func @transform_1(%arg0: i32) -> (i32, i32) {
    %c0_i32 = arith.constant 0 : i32
    %c0_i32_0 = arith.constant 0 : i32
    %c0_i32_1 = arith.constant 0 : i32
    return %c0_i32, %c0_i32_0 : i32, i32
  }
  func.func @transform_2(%arg0: i32) -> (i32, i32) {
    %c0_i32 = arith.constant 0 : i32
    %c0_i32_0 = arith.constant 0 : i32
    %c0_i32_1 = arith.constant 0 : i32
    return %c0_i32, %c0_i32_0 : i32, i32
  }
  func.func @transform_3(%arg0: i32) -> (i32, i32) {
    %c0_i32 = arith.constant 0 : i32
    %c0_i32_0 = arith.constant 0 : i32
    %c0_i32_1 = arith.constant 0 : i32
    return %c0_i32, %c0_i32_0 : i32, i32
  }
  func.func @transform_7(%arg0: i32) -> (i32, i32) {
    %c0_i32 = arith.constant 0 : i32
    %c0_i32_0 = arith.constant 0 : i32
    %c0_i32_1 = arith.constant 0 : i32
    return %c0_i32, %c0_i32_0 : i32, i32
  }
}

</mosaic_0001>

<llo_original>
// kernel: tpu_custom_call.1
$region0: #{tpu_custom_call.1}
  #allocation0 [shape = 'u32[]', space=smem, size = 0x4, offset = 0x4, fixed_abs, tag = 'smem constant byte address 0x4 - core index']
  #allocation1 [shape = 'u32[144,128]{1,0:T(1,128)}', space=vmem, size = 0x12000, scoped, tag = 'internal scratch']
  #allocation2 [shape = 'f32[32,128]{1,0:T(8,128)}', space=vmem, size = 0x4000, scoped, tag = 'scratch operand']
  #allocation3 [shape = 'f32[32,128]{1,0:T(8,128)}', space=vmem, size = 0x4000, scoped, tag = 'scratch operand']
  #allocation4 [shape = 'f32[32,128]{1,0:T(8,128)}', space=vmem, size = 0x4000, scoped, tag = 'scratch operand']
  #allocation5 [shape = 's32[3]{0}', space=sflag, size = 0xc, scoped, tag = 'scratch operand']
  #allocation6 [shape = 'f32[32,128]{1,0:T(8,128)}', space=vmem, size = 0x4000, scoped, tag = 'scratch operand']
  #allocation7 [shape = 'f32[8,32]{1,0:T(8,128)}', space=vmem, size = 0x1000, scoped, tag = 'scratch operand']
  #allocation8 [shape = 'f32[8,32]{1,0:T(8,128)}', space=vmem, size = 0x1000, scoped, tag = 'scratch operand']
  #allocation9 [shape = 'f32[8,32]{1,0:T(8,128)}', space=vmem, size = 0x1000, scoped, tag = 'scratch operand']
  #allocation12 [shape = 's32[]', space=sflag, size = 0x4, offset = 0, fixed_abs, tag = 'sflag constant byte address 0x0 - dummy sync flag']
  #allocation13 [shape = 's32[]', space=sflag, size = 0x4, offset = 0, fixed_abs, tag = 'sflag constant byte address 0x0 - dummy sync flag']
  #allocation14 [shape = 's32[]', space=sflag, size = 0x4, offset = 0, fixed_abs, tag = 'sflag constant byte address 0x0 - dummy sync flag']
  %s0 = inlined_call_operand.vmem [shape: f32[64,32], index: 0, kind: input, shape index: {}]
  %s1 = inlined_call_operand.vmem [shape: s32[8,1], index: 1, kind: input, shape index: {}]
  %s2 = inlined_call_operand.vmem [shape: f32[1,128], index: 2, kind: input, shape index: {}]
  %s3 = inlined_call_operand.vmem [shape: f32[1,128], index: 3, kind: input, shape index: {}]
  %s4 = inlined_call_operand.vmem [shape: f32[32,128], index: 4, kind: input, shape index: {}]
  %s5 = inlined_call_operand.vmem [shape: f32[32,128], index: 5, kind: input, shape index: {}]
  %s6 = inlined_call_operand.vmem [shape: f32[32,128], index: 6, kind: input, shape index: {}]
  %s7 = inlined_call_operand.hbm [shape: f32[8,128], index: 7, kind: output, shape index: {}]
  %s8 = sld [smem:[#allocation0]]
  $region159: #{tpu_custom_call.1} parent=0
    _
  %s10 = ssub.s32 1, %s8
  %s11 = scalar_select 0, %s10, %s8
  $region1: #{tpu_custom_call.1} parent=0
    #allocation10 [shape = 'u8[4096]{0}', space=vmem, size = 0x1000, scoped, tag = 'output window, operand 0, single buffered']
    #allocation11 [shape = 's32[2]{0}', space=sflag, size = 0x8, scoped, tag = 'scoped memory for tpu_custom_call.1']
    %12 = vsyncpa [#allocation11], 0
    loop: start=0, step=1, limit=4
    $region2: #{tpu_custom_call.1} parent=1 // loop_pre_header
      _
    $region3: #{tpu_custom_call.1} parent=1 // loop_header
      %s14 = sphi 0, %s18
      %p15 = scmp.ge.s32.totalorder %s14, 4
      %s24 = sphi 0, %s26
      %s27 = sphi 0, %s24
      %s28 = sphi 0, %s27
      %s44 = sphi 0, %s28
      %s48 = sphi 0, %s48
      %s50 = sphi 0, %s48
      %s51 = sphi 0, %s50
      %s65 = sphi 0, %s51
      %s69 = sphi 0, %s69
      %s71 = sphi 0, %s69
      %s72 = sphi 0, %s71
      %s86 = sphi 0, %s72
      %s90 = sphi 0, %s90
      %s92 = sphi 0, %s90
      %s93 = sphi 0, %s92
      %s107 = sphi 0, %s93
      %s111 = sphi 0, %s111
      %s113 = sphi 0, %s111
      %s114 = sphi 0, %s113
      %s128 = sphi 0, %s114
    $region4: #{tpu_custom_call.1} parent=1 // loop_header_branch
      %17 = sbr.rel (%p15) target = $region8
    $region5: #{tpu_custom_call.1} parent=1 // loop_body
      %s19 = ssub.s32 %s14, 1
      %s20 = ssub.s32 %s14, 2
      %s21 = sadd.s32 %s14, 1
      %s22 = ssub.s32 %s14, %s21
      %p23 = scmp.eq.s32.totalorder %s22, 0
      %s25 = sadd.s32 %s24, 1
      %s26 = scalar_select %p23, %s24, %s25
      %p29 = pneg %p23
      %p30 = scmp.eq.s32.totalorder %s14, 1
      %p31 = por %p29, %p30
      %p32 = scmp.ne.s32.totalorder %s24, %s27
      %p33 = scmp.eq.s32.totalorder %s14, 0
      %p34 = por %p32, %p33
      %p35 = scmp.ne.s32.totalorder %s24, %s27
      %p36 = scmp.eq.s32.totalorder %s19, 1
      %p37 = por %p35, %p36
      %p38 = scmp.ne.s32.totalorder %s27, %s28
      %p39 = scmp.eq.s32.totalorder %s19, 0
      %p40 = por %p38, %p39
      %p41 = scmp.ne.s32.totalorder %s27, %s28
      %p42 = scmp.eq.s32.totalorder %s20, 1
      %p43 = por %p41, %p42
      %p45 = scmp.ne.s32.totalorder %s28, %s44
      %p46 = scmp.eq.s32.totalorder %s20, 0
      %p47 = por %p45, %p46
      %s49 = sadd.s32 %s48, 1
      %p52 = scmp.eq.s32.totalorder %s14, 1
      %p53 = scmp.ne.s32.totalorder %s48, %s50
      %p54 = scmp.eq.s32.totalorder %s14, 0
      %p55 = por %p53, %p54
      %p56 = scmp.ne.s32.totalorder %s48, %s50
      %p57 = scmp.eq.s32.totalorder %s19, 1
      %p58 = por %p56, %p57
      %p59 = scmp.ne.s32.totalorder %s50, %s51
      %p60 = scmp.eq.s32.totalorder %s19, 0
      %p61 = por %p59, %p60
      %p62 = scmp.ne.s32.totalorder %s50, %s51
      %p63 = scmp.eq.s32.totalorder %s20, 1
      %p64 = por %p62, %p63
      %p66 = scmp.ne.s32.totalorder %s51, %s65
      %p67 = scmp.eq.s32.totalorder %s20, 0
      %p68 = por %p66, %p67
      %s70 = sadd.s32 %s69, 1
      %p73 = scmp.eq.s32.totalorder %s14, 1
      %p74 = scmp.ne.s32.totalorder %s69, %s71
      %p75 = scmp.eq.s32.totalorder %s14, 0
      %p76 = por %p74, %p75
      %p77 = scmp.ne.s32.totalorder %s69, %s71
      %p78 = scmp.eq.s32.totalorder %s19, 1
      %p79 = por %p77, %p78
      %p80 = scmp.ne.s32.totalorder %s71, %s72
      %p81 = scmp.eq.s32.totalorder %s19, 0
      %p82 = por %p80, %p81
      %p83 = scmp.ne.s32.totalorder %s71, %s72
      %p84 = scmp.eq.s32.totalorder %s20, 1
      %p85 = por %p83, %p84
      %p87 = scmp.ne.s32.totalorder %s72, %s86
      %p88 = scmp.eq.s32.totalorder %s20, 0
      %p89 = por %p87, %p88
      %s91 = sadd.s32 %s90, 1
      %p94 = scmp.eq.s32.totalorder %s14, 1
      %p95 = scmp.ne.s32.totalorder %s90, %s92
      %p96 = scmp.eq.s32.totalorder %s14, 0
      %p97 = por %p95, %p96
      %p98 = scmp.ne.s32.totalorder %s90, %s92
      %p99 = scmp.eq.s32.totalorder %s19, 1
      %p100 = por %p98, %p99
      %p101 = scmp.ne.s32.totalorder %s92, %s93
      %p102 = scmp.eq.s32.totalorder %s19, 0
      %p103 = por %p101, %p102
      %p104 = scmp.ne.s32.totalorder %s92, %s93
      %p105 = scmp.eq.s32.totalorder %s20, 1
      %p106 = por %p104, %p105
      %p108 = scmp.ne.s32.totalorder %s93, %s107
      %p109 = scmp.eq.s32.totalorder %s20, 0
      %p110 = por %p108, %p109
      %s112 = sadd.s32 %s111, 1
      %p115 = scmp.eq.s32.totalorder %s14, 1
      %p116 = scmp.ne.s32.totalorder %s111, %s113
      %p117 = scmp.eq.s32.totalorder %s14, 0
      %p118 = por %p116, %p117
      %p119 = scmp.ne.s32.totalorder %s111, %s113
      %p120 = scmp.eq.s32.totalorder %s19, 1
      %p121 = por %p119, %p120
      %p122 = scmp.ne.s32.totalorder %s113, %s114
      %p123 = scmp.eq.s32.totalorder %s19, 0
      %p124 = por %p122, %p123
      %p125 = scmp.ne.s32.totalorder %s113, %s114
      %p126 = scmp.eq.s32.totalorder %s20, 1
      %p127 = por %p125, %p126
      %p129 = scmp.ne.s32.totalorder %s114, %s128
      %p130 = scmp.eq.s32.totalorder %s20, 0
      %p131 = por %p129, %p130
      %p132 = scmp.le.s32.totalorder 1, %s14
      %p133 = scmp.lt.s32.totalorder %s14, 3
      %p134 = pnand %p132, %p133
      %p135 = pneg %p134
      // Predicated region
      $region9: #{tpu_custom_call.1} parent=5 // pred_check
        _
      $region10: #{tpu_custom_call.1} parent=5 // pred_check_branch
        %137 = sbr.rel (%p134) target = $region12
      $region11: #{tpu_custom_call.1} parent=5 // pred_region
        %s138 = ssub.s32 %s14, 1
        // Predicated region
        $region13: #{tpu_custom_call.1} parent=11 // pred_check
          %p139 = pneg %p61
        $region14: #{tpu_custom_call.1} parent=11 // pred_check_branch
          %141 = sbr.rel (%p139) target = $region16
        $region15: #{tpu_custom_call.1} parent=11 // pred_region
          _
        $region16: #{tpu_custom_call.1} parent=11 // pred_fallthru
          _
        // Predicated region
        $region17: #{tpu_custom_call.1} parent=11 // pred_check
          %p142 = pneg %p82
        $region18: #{tpu_custom_call.1} parent=11 // pred_check_branch
          %144 = sbr.rel (%p142) target = $region20
        $region19: #{tpu_custom_call.1} parent=11 // pred_region
          _
        $region20: #{tpu_custom_call.1} parent=11 // pred_fallthru
          _
        // Predicated region
        $region21: #{tpu_custom_call.1} parent=11 // pred_check
          %p145 = pneg %p103
        $region22: #{tpu_custom_call.1} parent=11 // pred_check_branch
          %147 = sbr.rel (%p145) target = $region24
        $region23: #{tpu_custom_call.1} parent=11 // pred_region
          _
        $region24: #{tpu_custom_call.1} parent=11 // pred_fallthru
          _
      $region12: #{tpu_custom_call.1} parent=5 // pred_fallthru
        _
      %p148 = scmp.lt.s32.totalorder %s14, 2
      // Predicated region
      $region25: #{tpu_custom_call.1} parent=5 // pred_check
        %p149 = pneg %p148
      $region26: #{tpu_custom_call.1} parent=5 // pred_check_branch
        %151 = sbr.rel (%p149) target = $region28
      $region27: #{tpu_custom_call.1} parent=5 // pred_region
        // Predicated region
        $region29: #{tpu_custom_call.1} parent=27 // pred_check
          %p152 = pneg %p34
        $region30: #{tpu_custom_call.1} parent=27 // pred_check_branch
          %154 = sbr.rel (%p152) target = $region32
        $region31: #{tpu_custom_call.1} parent=27 // pred_region
          %s155 = smul.u32 4, %s14
          %p156 = scmp.lt.s32.totalorder %s155, 7
          %s157 = scalar_select %p156, %s155, 7
          %s158 = smul.addr %s157, 8
          %s159 = scalar_lea.vmem %s0, %s158
          %s160 = smul.u32 4, %s14
        $region32: #{tpu_custom_call.1} parent=27 // pred_fallthru
          _
      $region28: #{tpu_custom_call.1} parent=5 // pred_fallthru
        _
      %p161 = scmp.le.s32.totalorder 1, %s14
      %p162 = scmp.lt.s32.totalorder %s14, 3
      %p163 = pnand %p161, %p162
      %p164 = pneg %p163
      // Predicated region
      $region33: #{tpu_custom_call.1} parent=5 // pred_check
        _
      $region34: #{tpu_custom_call.1} parent=5 // pred_check_branch
        %166 = sbr.rel (%p163) target = $region36
      $region35: #{tpu_custom_call.1} parent=5 // pred_region
        %s167 = ssub.s32 %s14, 1
        %s168 = smul.u32 4, %s19
        %p169 = scmp.lt.s32.totalorder %s168, 7
        %s170 = scalar_select %p169, %s168, 7
        %s171 = smul.addr %s170, 8
        %s172 = scalar_lea.vmem %s0, %s171
        %p173 = pneg %p40
        %p174 = pneg %p37
        %p175 = pneg %p61
        %p176 = pneg %p58
        %p177 = pneg %p82
        %p178 = pneg %p79
        %p179 = pneg %p103
        %p180 = pneg %p100
        %p181 = pneg %p124
        %p182 = pneg %p121
        %s183 = smul.u32 4, %s19
        %p184 = scmp.lt.s32.totalorder %s183, 7
        %s185 = scalar_select %p184, %s183, 7
        %s186 = smul.addr %s185, 8
        %s187 = scalar_lea.vmem %s0, %s186
        %s188 = smul.u32 4, %s19
        %p189 = scmp.eq.s32.totalorder %s19, 0
        // Predicated region
        $region37: #{tpu_custom_call.1} parent=35 // pred_check
          %p190 = pneg %p189
        $region38: #{tpu_custom_call.1} parent=35 // pred_check_branch
          %192 = sbr.rel (%p190) target = $region40
        $region39: #{tpu_custom_call.1} parent=35 // pred_region
          %p194 = scmp.lt.u32.totalorder 32, 8
          %p195 = pneg %p194
          // Predicated region
          $region41: #{tpu_custom_call.1} parent=39 // pred_check
            _
          $region42: #{tpu_custom_call.1} parent=39 // pred_check_branch
            %197 = sbr.rel (%p194) target = $region44
          $region43: #{tpu_custom_call.1} parent=39 // pred_region
            %s213 = sand.u32 32, 7
            %p214 = scmp.eq.s32.totalorder %s213, 0
            // Predicated region
            $region56: #{tpu_custom_call.1} parent=43 // pred_check
              %p215 = pneg %p214
            $region57: #{tpu_custom_call.1} parent=43 // pred_check_branch
              %217 = sbr.rel (%p215) target = $region59
            $region58: #{tpu_custom_call.1} parent=43 // pred_region
              loop: start=0, step=1, limit=1
              $region60: #{tpu_custom_call.1} parent=58 // loop_pre_header
                _
              $region61: #{tpu_custom_call.1} parent=58 // loop_header
                %s219 = sphi 0, %s223
                %p220 = scmp.ge.s32.totalorder %s219, 1
                %s224 = sphi %s4, %s4
                %s225 = sphi [#allocation2], [#allocation2]
              $region62: #{tpu_custom_call.1} parent=58 // loop_header_branch
                %222 = sbr.rel (%p220) target = $region66
              $region63: #{tpu_custom_call.1} parent=58 // loop_body
                %v226 = vld [vmem:[%s224] sm:$0xff]
                %227 = vst [vmem:[%s225] sm:$0xff] %v226
                %v228 = vld [vmem:[%s224 + $0x8] sm:$0xff]
                %229 = vst [vmem:[%s225 + $0x8] sm:$0xff] %v228
                %v230 = vld [vmem:[%s224 + $0x10] sm:$0xff]
                %231 = vst [vmem:[%s225 + $0x10] sm:$0xff] %v230
                %v232 = vld [vmem:[%s224 + $0x18] sm:$0xff]
                %233 = vst [vmem:[%s225 + $0x18] sm:$0xff] %v232
              $region64: #{tpu_custom_call.1} parent=58 // loop_footer
                %s223 = sadd.s32 1, %s219
              $region65: #{tpu_custom_call.1} parent=58 // loop_footer_branch
                %218 = sbr.rel target = $region61
              $region66: #{tpu_custom_call.1} parent=58 // loop_exit
                _
            $region59: #{tpu_custom_call.1} parent=43 // pred_fallthru
              _
            %p234 = pneg %p214
            // Predicated region
            $region67: #{tpu_custom_call.1} parent=43 // pred_check
              _
            $region68: #{tpu_custom_call.1} parent=43 // pred_check_branch
              %236 = sbr.rel (%p214) target = $region70
            $region69: #{tpu_custom_call.1} parent=43 // pred_region
              %s237 = sand.u32 32, 7
            $region70: #{tpu_custom_call.1} parent=43 // pred_fallthru
              _
          $region44: #{tpu_custom_call.1} parent=39 // pred_fallthru
            _
          // Predicated region
          $region45: #{tpu_custom_call.1} parent=39 // pred_check
            %p198 = pneg %p194
          $region46: #{tpu_custom_call.1} parent=39 // pred_check_branch
            %200 = sbr.rel (%p198) target = $region48
          $region47: #{tpu_custom_call.1} parent=39 // pred_region
            %s201 = sshll.u32 1, 32
            %s202 = ssub.s32 %s201, 1
            loop: start=0, step=1, limit=1
            $region49: #{tpu_custom_call.1} parent=47 // loop_pre_header
              _
            $region50: #{tpu_custom_call.1} parent=47 // loop_header
              %s204 = sphi 0, %s208
              %p205 = scmp.ge.s32.totalorder %s204, 1
              %s209 = sphi %s4, %s4
              %s210 = sphi [#allocation2], [#allocation2]
            $region51: #{tpu_custom_call.1} parent=47 // loop_header_branch
              %207 = sbr.rel (%p205) target = $region55
            $region52: #{tpu_custom_call.1} parent=47 // loop_body
              %v211 = vld [vmem:[%s209] sm:%s202]
              %212 = vst [vmem:[%s210] sm:%s202] %v211
            $region53: #{tpu_custom_call.1} parent=47 // loop_footer
              %s208 = sadd.s32 1, %s204
            $region54: #{tpu_custom_call.1} parent=47 // loop_footer_branch
              %203 = sbr.rel target = $region50
            $region55: #{tpu_custom_call.1} parent=47 // loop_exit
              _
          $region48: #{tpu_custom_call.1} parent=39 // pred_fallthru
            _
          // Predicated region
          $region71: #{tpu_custom_call.1} parent=39 // pred_check
            _
          $region72: #{tpu_custom_call.1} parent=39 // pred_check_branch
            %240 = sbr.rel (0) target = $region74
          $region73: #{tpu_custom_call.1} parent=39 // pred_region
            %241 = vsyncadd [#allocation5], 512
          $region74: #{tpu_custom_call.1} parent=39 // pred_fallthru
            _
          %s242 = scalar_lea.sflag [#allocation5], 1
          %p244 = scmp.lt.u32.totalorder 32, 8
          %p245 = pneg %p244
          // Predicated region
          $region75: #{tpu_custom_call.1} parent=39 // pred_check
            _
          $region76: #{tpu_custom_call.1} parent=39 // pred_check_branch
            %247 = sbr.rel (%p244) target = $region78
          $region77: #{tpu_custom_call.1} parent=39 // pred_region
            %s263 = sand.u32 32, 7
            %p264 = scmp.eq.s32.totalorder %s263, 0
            // Predicated region
            $region90: #{tpu_custom_call.1} parent=77 // pred_check
              %p265 = pneg %p264
            $region91: #{tpu_custom_call.1} parent=77 // pred_check_branch
              %267 = sbr.rel (%p265) target = $region93
            $region92: #{tpu_custom_call.1} parent=77 // pred_region
              loop: start=0, step=1, limit=1
              $region94: #{tpu_custom_call.1} parent=92 // loop_pre_header
                _
              $region95: #{tpu_custom_call.1} parent=92 // loop_header
                %s269 = sphi 0, %s273
                %p270 = scmp.ge.s32.totalorder %s269, 1
                %s274 = sphi %s5, %s5
                %s275 = sphi [#allocation3], [#allocation3]
              $region96: #{tpu_custom_call.1} parent=92 // loop_header_branch
                %272 = sbr.rel (%p270) target = $region100
              $region97: #{tpu_custom_call.1} parent=92 // loop_body
                %v276 = vld [vmem:[%s274] sm:$0xff]
                %277 = vst [vmem:[%s275] sm:$0xff] %v276
                %v278 = vld [vmem:[%s274 + $0x8] sm:$0xff]
                %279 = vst [vmem:[%s275 + $0x8] sm:$0xff] %v278
                %v280 = vld [vmem:[%s274 + $0x10] sm:$0xff]
                %281 = vst [vmem:[%s275 + $0x10] sm:$0xff] %v280
                %v282 = vld [vmem:[%s274 + $0x18] sm:$0xff]
                %283 = vst [vmem:[%s275 + $0x18] sm:$0xff] %v282
              $region98: #{tpu_custom_call.1} parent=92 // loop_footer
                %s273 = sadd.s32 1, %s269
              $region99: #{tpu_custom_call.1} parent=92 // loop_footer_branch
                %268 = sbr.rel target = $region95
              $region100: #{tpu_custom_call.1} parent=92 // loop_exit
                _
            $region93: #{tpu_custom_call.1} parent=77 // pred_fallthru
              _
            %p284 = pneg %p264
            // Predicated region
            $region101: #{tpu_custom_call.1} parent=77 // pred_check
              _
            $region102: #{tpu_custom_call.1} parent=77 // pred_check_branch
              %286 = sbr.rel (%p264) target = $region104
            $region103: #{tpu_custom_call.1} parent=77 // pred_region
              %s287 = sand.u32 32, 7
            $region104: #{tpu_custom_call.1} parent=77 // pred_fallthru
              _
          $region78: #{tpu_custom_call.1} parent=39 // pred_fallthru
            _
          // Predicated region
          $region79: #{tpu_custom_call.1} parent=39 // pred_check
            %p248 = pneg %p244
          $region80: #{tpu_custom_call.1} parent=39 // pred_check_branch
            %250 = sbr.rel (%p248) target = $region82
          $region81: #{tpu_custom_call.1} parent=39 // pred_region
            %s251 = sshll.u32 1, 32
            %s252 = ssub.s32 %s251, 1
            loop: start=0, step=1, limit=1
            $region83: #{tpu_custom_call.1} parent=81 // loop_pre_header
              _
            $region84: #{tpu_custom_call.1} parent=81 // loop_header
              %s254 = sphi 0, %s258
              %p255 = scmp.ge.s32.totalorder %s254, 1
              %s259 = sphi %s5, %s5
              %s260 = sphi [#allocation3], [#allocation3]
            $region85: #{tpu_custom_call.1} parent=81 // loop_header_branch
              %257 = sbr.rel (%p255) target = $region89
            $region86: #{tpu_custom_call.1} parent=81 // loop_body
              %v261 = vld [vmem:[%s259] sm:%s252]
              %262 = vst [vmem:[%s260] sm:%s252] %v261
            $region87: #{tpu_custom_call.1} parent=81 // loop_footer
              %s258 = sadd.s32 1, %s254
            $region88: #{tpu_custom_call.1} parent=81 // loop_footer_branch
              %253 = sbr.rel target = $region84
            $region89: #{tpu_custom_call.1} parent=81 // loop_exit
              _
          $region82: #{tpu_custom_call.1} parent=39 // pred_fallthru
            _
          // Predicated region
          $region105: #{tpu_custom_call.1} parent=39 // pred_check
            _
          $region106: #{tpu_custom_call.1} parent=39 // pred_check_branch
            %290 = sbr.rel (0) target = $region108
          $region107: #{tpu_custom_call.1} parent=39 // pred_region
            %291 = vsyncadd %s242, 512
          $region108: #{tpu_custom_call.1} parent=39 // pred_fallthru
            _
          %s292 = scalar_lea.sflag [#allocation5], 2
          %p294 = scmp.lt.u32.totalorder 32, 8
          %p295 = pneg %p294
          // Predicated region
          $region109: #{tpu_custom_call.1} parent=39 // pred_check
            _
          $region110: #{tpu_custom_call.1} parent=39 // pred_check_branch
            %297 = sbr.rel (%p294) target = $region112
          $region111: #{tpu_custom_call.1} parent=39 // pred_region
            %s313 = sand.u32 32, 7
            %p314 = scmp.eq.s32.totalorder %s313, 0
            // Predicated region
            $region124: #{tpu_custom_call.1} parent=111 // pred_check
              %p315 = pneg %p314
            $region125: #{tpu_custom_call.1} parent=111 // pred_check_branch
              %317 = sbr.rel (%p315) target = $region127
            $region126: #{tpu_custom_call.1} parent=111 // pred_region
              loop: start=0, step=1, limit=1
              $region128: #{tpu_custom_call.1} parent=126 // loop_pre_header
                _
              $region129: #{tpu_custom_call.1} parent=126 // loop_header
                %s319 = sphi 0, %s323
                %p320 = scmp.ge.s32.totalorder %s319, 1
                %s324 = sphi %s6, %s6
                %s325 = sphi [#allocation4], [#allocation4]
              $region130: #{tpu_custom_call.1} parent=126 // loop_header_branch
                %322 = sbr.rel (%p320) target = $region134
              $region131: #{tpu_custom_call.1} parent=126 // loop_body
                %v326 = vld [vmem:[%s324] sm:$0xff]
                %327 = vst [vmem:[%s325] sm:$0xff] %v326
                %v328 = vld [vmem:[%s324 + $0x8] sm:$0xff]
                %329 = vst [vmem:[%s325 + $0x8] sm:$0xff] %v328
                %v330 = vld [vmem:[%s324 + $0x10] sm:$0xff]
                %331 = vst [vmem:[%s325 + $0x10] sm:$0xff] %v330
                %v332 = vld [vmem:[%s324 + $0x18] sm:$0xff]
                %333 = vst [vmem:[%s325 + $0x18] sm:$0xff] %v332
              $region132: #{tpu_custom_call.1} parent=126 // loop_footer
                %s323 = sadd.s32 1, %s319
              $region133: #{tpu_custom_call.1} parent=126 // loop_footer_branch
                %318 = sbr.rel target = $region129
              $region134: #{tpu_custom_call.1} parent=126 // loop_exit
                _
            $region127: #{tpu_custom_call.1} parent=111 // pred_fallthru
              _
            %p334 = pneg %p314
            // Predicated region
            $region135: #{tpu_custom_call.1} parent=111 // pred_check
              _
            $region136: #{tpu_custom_call.1} parent=111 // pred_check_branch
              %336 = sbr.rel (%p314) target = $region138
            $region137: #{tpu_custom_call.1} parent=111 // pred_region
              %s337 = sand.u32 32, 7
            $region138: #{tpu_custom_call.1} parent=111 // pred_fallthru
              _
          $region112: #{tpu_custom_call.1} parent=39 // pred_fallthru
            _
          // Predicated region
          $region113: #{tpu_custom_call.1} parent=39 // pred_check
            %p298 = pneg %p294
          $region114: #{tpu_custom_call.1} parent=39 // pred_check_branch
            %300 = sbr.rel (%p298) target = $region116
          $region115: #{tpu_custom_call.1} parent=39 // pred_region
            %s301 = sshll.u32 1, 32
            %s302 = ssub.s32 %s301, 1
            loop: start=0, step=1, limit=1
            $region117: #{tpu_custom_call.1} parent=115 // loop_pre_header
              _
            $region118: #{tpu_custom_call.1} parent=115 // loop_header
              %s304 = sphi 0, %s308
              %p305 = scmp.ge.s32.totalorder %s304, 1
              %s309 = sphi %s6, %s6
              %s310 = sphi [#allocation4], [#allocation4]
            $region119: #{tpu_custom_call.1} parent=115 // loop_header_branch
              %307 = sbr.rel (%p305) target = $region123
            $region120: #{tpu_custom_call.1} parent=115 // loop_body
              %v311 = vld [vmem:[%s309] sm:%s302]
              %312 = vst [vmem:[%s310] sm:%s302] %v311
            $region121: #{tpu_custom_call.1} parent=115 // loop_footer
              %s308 = sadd.s32 1, %s304
            $region122: #{tpu_custom_call.1} parent=115 // loop_footer_branch
              %303 = sbr.rel target = $region118
            $region123: #{tpu_custom_call.1} parent=115 // loop_exit
              _
          $region116: #{tpu_custom_call.1} parent=39 // pred_fallthru
            _
          // Predicated region
          $region139: #{tpu_custom_call.1} parent=39 // pred_check
            _
          $region140: #{tpu_custom_call.1} parent=39 // pred_check_branch
            %340 = sbr.rel (0) target = $region142
          $region141: #{tpu_custom_call.1} parent=39 // pred_region
            %341 = vsyncadd %s292, 512
          $region142: #{tpu_custom_call.1} parent=39 // pred_fallthru
            _
          %vm342 = vcmask 261120
          %343 = vst.msk [vmem:[#allocation7] sm:$0xff] %vm342, 0.0
          %344 = vst.msk [vmem:[#allocation8] sm:$0xff] %vm342, 0.0
          %345 = vst.msk [vmem:[#allocation9] sm:$0xff] %vm342, 0.0
          %s346 = smul.u32 32, 1
          %s347 = sshll.u32 %s346, 4
          %348 = dma.done [#allocation5], %s347
          %s349 = sshll.u32 %s346, 4
          %350 = dma.done %s242, %s349
          %s351 = sshll.u32 %s346, 4
          %352 = dma.done %s292, %s351
        $region40: #{tpu_custom_call.1} parent=35 // pred_fallthru
          _
        %v353 = vld [vmem:[%s187] sm:$0xff]
        %v354 = vld [vmem:[%s187 + $0x8] sm:$0xff]
        %v355 = vld [vmem:[%s187 + $0x10] sm:$0xff]
        %v356 = vld [vmem:[%s187 + $0x18] sm:$0xff]
        %v357 = vld [vmem:[#allocation2] sm:$0xff]
        %v358 = vld [vmem:[#allocation2 + $0x8] sm:$0xff]
        %v359 = vld [vmem:[#allocation2 + $0x10] sm:$0xff]
        %v360 = vld [vmem:[#allocation2 + $0x18] sm:$0xff]
        %v361 = vld [vmem:[%s2] sm:$0x1]
        %v363 = vlaneseq
        %v364 = vshrl.u32 %v363, 7
        %v365 = vsub.s32 0, %v364
        %v366 = vrot.slane %v361, %v365
        %vm368 = vcmask 261120
        %v370 = vsel %vm368, %v353, 0
        %v373 = vsel %vm368, %v354, 0
        %v376 = vsel %vm368, %v355, 0
        %v379 = vsel %vm368, %v356, 0
        %381 = vmatprep.subr.mxu0 0.0
        %382 = vmatpush1.msra.mxu0 0.0
        %383 = vmatprep.subr.mxu0 0.0
        %384 = vmatpush1.msra.mxu0 0.0
        %385 = vmatprep.subr.mxu0 0.0
        %386 = vmatpush1.msra.mxu0 0.0
        %387 = vmatprep.subr.mxu0 0.0
        %388 = vmatpush1.msra.mxu0 0.0
        %389 = vmatprep.subr.mxu0 0.0
        %390 = vmatpush1.msra.mxu0 0.0
        %391 = vmatprep.subr.mxu0 0.0
        %392 = vmatpush1.msra.mxu0 0.0
        %393 = vmatprep.subr.mxu0 0.0
        %394 = vmatpush1.msra.mxu0 0.0
        %395 = vmatprep.subr.mxu0 0.0
        %396 = vmatpush1.msra.mxu0 0.0
        %397 = vmatprep.subr.mxu0 0.0
        %398 = vmatpush1.msra.mxu0 0.0
        %399 = vmatprep.subr.mxu0 0.0
        %400 = vmatpush1.msra.mxu0 0.0
        %401 = vmatprep.subr.mxu0 0.0
        %402 = vmatpush1.msra.mxu0 0.0
        %403 = vmatprep.subr.mxu0 0.0
        %404 = vmatpush1.msra.mxu0 0.0
        %405 = vmatprep.subr.mxu0 0.0
        %406 = vmatpush1.msra.mxu0 %v360
        %407 = vmatprep.subr.mxu0 0.0
        %408 = vmatpush1.msra.mxu0 %v359
        %409 = vmatprep.subr.mxu0 0.0
        %410 = vmatpush1.msra.mxu0 %v358
        %411 = vmatprep.subr.mxu0 0.0
        %412 = vmatpush1.msra.mxu0 %v357
        %413 = vmatprep.subr.mxu0 0.0
        %414 = vmatpush2.msra.mxu0 0.0
        %415 = vmatprep.subr.mxu0 0.0
        %416 = vmatpush2.msra.mxu0 0.0
        %417 = vmatprep.subr.mxu0 0.0
        %418 = vmatpush2.msra.mxu0 0.0
        %419 = vmatprep.subr.mxu0 0.0
        %420 = vmatpush2.msra.mxu0 0.0
        %421 = vmatprep.subr.mxu0 0.0
        %422 = vmatpush2.msra.mxu0 0.0
        %423 = vmatprep.subr.mxu0 0.0
        %424 = vmatpush2.msra.mxu0 0.0
        %425 = vmatprep.subr.mxu0 0.0
        %426 = vmatpush2.msra.mxu0 0.0
        %427 = vmatprep.subr.mxu0 0.0
        %428 = vmatpush2.msra.mxu0 0.0
        %429 = vmatprep.subr.mxu0 0.0
        %430 = vmatpush2.msra.mxu0 0.0
        %431 = vmatprep.subr.mxu0 0.0
        %432 = vmatpush2.msra.mxu0 0.0
        %433 = vmatprep.subr.mxu0 0.0
        %434 = vmatpush2.msra.mxu0 0.0
        %435 = vmatprep.subr.mxu0 0.0
        %436 = vmatpush2.msra.mxu0 0.0
        %437 = vmatprep.subr.mxu0 0.0
        %438 = vmatpush2.msra.mxu0 0.0
        %439 = vmatprep.subr.mxu0 0.0
        %440 = vmatpush2.msra.mxu0 0.0
        %441 = vmatprep.subr.mxu0 0.0
        %442 = vmatpush2.msra.mxu0 0.0
        %443 = vmatprep.subr.mxu0 0.0
        %444 = vmatpush2.msra.mxu0 0.0
        %445 = vmatprep.mubr.f32.mxu0 0.0
        %446 = vmatmul.mubr.f32.gmra.mxu0 %v370
        %v447 = vpop.f32.mrf.mxu0
        %v448 = vadd.f32 %v366, %v447
        %v449 = vpop.f32.mrf.mxu0
        %450 = vmatprep.mubr.f32.mxu0 0.0
        %451 = vmatmul.mubr.f32.gmra.mxu0 %v373
        %v452 = vpop.f32.mrf.mxu0
        %v453 = vadd.f32 %v366, %v452
        %v454 = vpop.f32.mrf.mxu0
        %455 = vmatprep.mubr.f32.mxu0 0.0
        %456 = vmatmul.mubr.f32.gmra.mxu0 %v376
        %v457 = vpop.f32.mrf.mxu0
        %v458 = vadd.f32 %v366, %v457
        %v459 = vpop.f32.mrf.mxu0
        %460 = vmatprep.mubr.f32.mxu0 0.0
        %461 = vmatmul.mubr.f32.gmra.mxu0 %v379
        %v462 = vpop.f32.mrf.mxu0
        %v463 = vadd.f32 %v366, %v462
        %v464 = vpop.f32.mrf.mxu0
        %465 = vdwg.mxu0
        %466 = vst [vmem:[#allocation6] sm:$0xff] %v448
        %467 = vst [vmem:[#allocation6 + $0x8] sm:$0xff] %v453
        %468 = vst [vmem:[#allocation6 + $0x10] sm:$0xff] %v458
        %469 = vst [vmem:[#allocation6 + $0x18] sm:$0xff] %v463
        %v470 = vld [vmem:[#allocation3] sm:$0xff]
        %v471 = vld [vmem:[#allocation3 + $0x8] sm:$0xff]
        %v472 = vld [vmem:[#allocation3 + $0x10] sm:$0xff]
        %v473 = vld [vmem:[#allocation3 + $0x18] sm:$0xff]
        %v474 = vld [vmem:[%s1] sm:$0xff]
        %s475 = smul.u32 %s19, 4
        %v476 = vld [vmem:[#allocation7] sm:$0xff]
        %v477 = vld [vmem:[#allocation8] sm:$0xff]
        %v478 = vld [vmem:[#allocation9] sm:$0xff]
        %v479 = vld [vmem:[#allocation6] sm:$0xff]
        %v481 = vsel %vm368, %v476, 0
        %483 = vmatprep.subr.mxu0 0.0
        %484 = vmatpush1.msra.mxu0 0.0
        %485 = vmatprep.subr.mxu0 0.0
        %486 = vmatpush1.msra.mxu0 0.0
        %487 = vmatprep.subr.mxu0 0.0
        %488 = vmatpush1.msra.mxu0 0.0
        %489 = vmatprep.subr.mxu0 0.0
        %490 = vmatpush1.msra.mxu0 0.0
        %491 = vmatprep.subr.mxu0 0.0
        %492 = vmatpush1.msra.mxu0 0.0
        %493 = vmatprep.subr.mxu0 0.0
        %494 = vmatpush1.msra.mxu0 0.0
        %495 = vmatprep.subr.mxu0 0.0
        %496 = vmatpush1.msra.mxu0 0.0
        %497 = vmatprep.subr.mxu0 0.0
        %498 = vmatpush1.msra.mxu0 0.0
        %499 = vmatprep.subr.mxu0 0.0
        %500 = vmatpush1.msra.mxu0 0.0
        %501 = vmatprep.subr.mxu0 0.0
        %502 = vmatpush1.msra.mxu0 0.0
        %503 = vmatprep.subr.mxu0 0.0
        %504 = vmatpush1.msra.mxu0 0.0
        %505 = vmatprep.subr.mxu0 0.0
        %506 = vmatpush1.msra.mxu0 0.0
        %507 = vmatprep.subr.mxu0 0.0
        %508 = vmatpush1.msra.mxu0 %v473
        %509 = vmatprep.subr.mxu0 0.0
        %510 = vmatpush1.msra.mxu0 %v472
        %511 = vmatprep.subr.mxu0 0.0
        %512 = vmatpush1.msra.mxu0 %v471
        %513 = vmatprep.subr.mxu0 0.0
        %514 = vmatpush1.msra.mxu0 %v470
        %515 = vmatprep.subr.mxu0 0.0
        %516 = vmatpush2.msra.mxu0 0.0
        %517 = vmatprep.subr.mxu0 0.0
        %518 = vmatpush2.msra.mxu0 0.0
        %519 = vmatprep.subr.mxu0 0.0
        %520 = vmatpush2.msra.mxu0 0.0
        %521 = vmatprep.subr.mxu0 0.0
        %522 = vmatpush2.msra.mxu0 0.0
        %523 = vmatprep.subr.mxu0 0.0
        %524 = vmatpush2.msra.mxu0 0.0
        %525 = vmatprep.subr.mxu0 0.0
        %526 = vmatpush2.msra.mxu0 0.0
        %527 = vmatprep.subr.mxu0 0.0
        %528 = vmatpush2.msra.mxu0 0.0
        %529 = vmatprep.subr.mxu0 0.0
        %530 = vmatpush2.msra.mxu0 0.0
        %531 = vmatprep.subr.mxu0 0.0
        %532 = vmatpush2.msra.mxu0 0.0
        %533 = vmatprep.subr.mxu0 0.0
        %534 = vmatpush2.msra.mxu0 0.0
        %535 = vmatprep.subr.mxu0 0.0
        %536 = vmatpush2.msra.mxu0 0.0
        %537 = vmatprep.subr.mxu0 0.0
        %538 = vmatpush2.msra.mxu0 0.0
        %539 = vmatprep.subr.mxu0 0.0
        %540 = vmatpush2.msra.mxu0 0.0
        %541 = vmatprep.subr.mxu0 0.0
        %542 = vmatpush2.msra.mxu0 0.0
        %543 = vmatprep.subr.mxu0 0.0
        %544 = vmatpush2.msra.mxu0 0.0
        %545 = vmatprep.subr.mxu0 0.0
        %546 = vmatpush2.msra.mxu0 0.0
        %547 = vmatprep.mubr.f32.mxu0 0.0
        %548 = vmatmul.mubr.f32.gmra.mxu0 %v481
        %v549 = vpop.f32.mrf.mxu0
        %v550 = vadd.f32 0.0, %v549
        %v551 = vpop.f32.mrf.mxu0
        %552 = vdwg.mxu0
        %v553 = vadd.f32 %v479, %v550
        %v554 = vxor.u32 %v553, 2147483648
        %v555 = vmul.f32 %v554, 1.442695
        %v556 = vpow.pop %v555
        %v557 = vadd.f32 %v556, 1.0
        %v558 = vrcp.pop %v557
        %v559 = vmul.f32 1.0, %v558
        %v560 = vtanh.pop %v553
        %562 = vrot.lane.b32.xlu0 %v477, 32
        %v563 = vpop.permute.xlu0 %562
        %v565 = vmul.f32 %v559, %v563
        %567 = vrot.lane.b32.xlu0 %v560, 64
        %v568 = vpop.permute.xlu0 %567
        %v570 = vmul.f32 %v559, %v568
        %572 = vrot.lane.b32.xlu0 %v570, 32
        %v573 = vpop.permute.xlu0 %572
        %v575 = vadd.f32 %v565, %v573
        %v576 = vtanh.pop %v575
        %578 = vrot.lane.b32.xlu0 %v576, 64
        %v579 = vpop.permute.xlu0 %578
        %v581 = vmul.f32 %v559, %v579
        %v582 = vsub.s32 %v474, 1
        %v583 = vstv %s475
        %vm584 = vcmp.eq.s32.totalorder %v582, %v583
        %v585 = vsel %vm584, 1, 0
        %586 = vset.pattern.permute.xlu0 0
        %587 = vperm.xlu0 %586, %v585
        %v588 = vpop.permute.xlu0 %587
        %vm589 = vcmp.eq.s32.totalorder %v588, 1
        %591 = vrot.lane.b32.xlu0 %v478, 96
        %v592 = vpop.permute.xlu0 %591
        %v594 = vsel %vm589, %v581, %v592
        %s595 = scalar_lea.vmem [#allocation6], 8
        %v596 = vld [vmem:[%s595] sm:$0xff]
        %598 = vrot.lane.b32.xlu0 %v581, 32
        %v599 = vpop.permute.xlu0 %598
        %v600 = vsel %vm368, %v599, 0
        %602 = vmatprep.subr.mxu0 0.0
        %603 = vmatpush1.msra.mxu0 0.0
        %604 = vmatprep.subr.mxu0 0.0
        %605 = vmatpush1.msra.mxu0 0.0
        %606 = vmatprep.subr.mxu0 0.0
        %607 = vmatpush1.msra.mxu0 0.0
        %608 = vmatprep.subr.mxu0 0.0
        %609 = vmatpush1.msra.mxu0 0.0
        %610 = vmatprep.subr.mxu0 0.0
        %611 = vmatpush1.msra.mxu0 0.0
        %612 = vmatprep.subr.mxu0 0.0
        %613 = vmatpush1.msra.mxu0 0.0
        %614 = vmatprep.subr.mxu0 0.0
        %615 = vmatpush1.msra.mxu0 0.0
        %616 = vmatprep.subr.mxu0 0.0
        %617 = vmatpush1.msra.mxu0 0.0
        %618 = vmatprep.subr.mxu0 0.0
        %619 = vmatpush1.msra.mxu0 0.0
        %620 = vmatprep.subr.mxu0 0.0
        %621 = vmatpush1.msra.mxu0 0.0
        %622 = vmatprep.subr.mxu0 0.0
        %623 = vmatpush1.msra.mxu0 0.0
        %624 = vmatprep.subr.mxu0 0.0
        %625 = vmatpush1.msra.mxu0 0.0
        %626 = vmatprep.subr.mxu0 0.0
        %627 = vmatpush1.msra.mxu0 %v473
        %628 = vmatprep.subr.mxu0 0.0
        %629 = vmatpush1.msra.mxu0 %v472
        %630 = vmatprep.subr.mxu0 0.0
        %631 = vmatpush1.msra.mxu0 %v471
        %632 = vmatprep.subr.mxu0 0.0
        %633 = vmatpush1.msra.mxu0 %v470
        %634 = vmatprep.subr.mxu0 0.0
        %635 = vmatpush2.msra.mxu0 0.0
        %636 = vmatprep.subr.mxu0 0.0
        %637 = vmatpush2.msra.mxu0 0.0
        %638 = vmatprep.subr.mxu0 0.0
        %639 = vmatpush2.msra.mxu0 0.0
        %640 = vmatprep.subr.mxu0 0.0
        %641 = vmatpush2.msra.mxu0 0.0
        %642 = vmatprep.subr.mxu0 0.0
        %643 = vmatpush2.msra.mxu0 0.0
        %644 = vmatprep.subr.mxu0 0.0
        %645 = vmatpush2.msra.mxu0 0.0
        %646 = vmatprep.subr.mxu0 0.0
        %647 = vmatpush2.msra.mxu0 0.0
        %648 = vmatprep.subr.mxu0 0.0
        %649 = vmatpush2.msra.mxu0 0.0
        %650 = vmatprep.subr.mxu0 0.0
        %651 = vmatpush2.msra.mxu0 0.0
        %652 = vmatprep.subr.mxu0 0.0
        %653 = vmatpush2.msra.mxu0 0.0
        %654 = vmatprep.subr.mxu0 0.0
        %655 = vmatpush2.msra.mxu0 0.0
        %656 = vmatprep.subr.mxu0 0.0
        %657 = vmatpush2.msra.mxu0 0.0
        %658 = vmatprep.subr.mxu0 0.0
        %659 = vmatpush2.msra.mxu0 0.0
        %660 = vmatprep.subr.mxu0 0.0
        %661 = vmatpush2.msra.mxu0 0.0
        %662 = vmatprep.subr.mxu0 0.0
        %663 = vmatpush2.msra.mxu0 0.0
        %664 = vmatprep.subr.mxu0 0.0
        %665 = vmatpush2.msra.mxu0 0.0
        %666 = vmatprep.mubr.f32.mxu0 0.0
        %667 = vmatmul.mubr.f32.gmra.mxu0 %v600
        %v668 = vpop.f32.mrf.mxu0
        %v669 = vadd.f32 0.0, %v668
        %v670 = vpop.f32.mrf.mxu0
        %671 = vdwg.mxu0
        %v672 = vadd.f32 %v596, %v669
        %v673 = vxor.u32 %v672, 2147483648
        %v674 = vmul.f32 %v673, 1.442695
        %v675 = vpow.pop %v674
        %v676 = vadd.f32 %v675, 1.0
        %v677 = vrcp.pop %v676
        %v678 = vmul.f32 1.0, %v677
        %v679 = vtanh.pop %v672
        %v680 = vmul.f32 %v678, %v575
        %682 = vrot.lane.b32.xlu0 %v679, 64
        %v683 = vpop.permute.xlu0 %682
        %v685 = vmul.f32 %v678, %v683
        %687 = vrot.lane.b32.xlu0 %v685, 32
        %v688 = vpop.permute.xlu0 %687
        %v690 = vadd.f32 %v680, %v688
        %v691 = vtanh.pop %v690
        %693 = vrot.lane.b32.xlu0 %v691, 64
        %v694 = vpop.permute.xlu0 %693
        %v696 = vmul.f32 %v678, %v694
        %s697 = sadd.s32 %s475, 1
        %v698 = vstv %s697
        %vm699 = vcmp.eq.s32.totalorder %v582, %v698
        %v700 = vsel %vm699, 1, 0
        %701 = vset.pattern.permute.xlu0 0
        %702 = vperm.xlu0 %701, %v700
        %v703 = vpop.permute.xlu0 %702
        %vm704 = vcmp.eq.s32.totalorder %v703, 1
        %v705 = vsel %vm704, %v696, %v594
        %s706 = scalar_lea.vmem [#allocation6], 16
        %v707 = vld [vmem:[%s706] sm:$0xff]
        %709 = vrot.lane.b32.xlu0 %v696, 32
        %v710 = vpop.permute.xlu0 %709
        %v711 = vsel %vm368, %v710, 0
        %713 = vmatprep.subr.mxu0 0.0
        %714 = vmatpush1.msra.mxu0 0.0
        %715 = vmatprep.subr.mxu0 0.0
        %716 = vmatpush1.msra.mxu0 0.0
        %717 = vmatprep.subr.mxu0 0.0
        %718 = vmatpush1.msra.mxu0 0.0
        %719 = vmatprep.subr.mxu0 0.0
        %720 = vmatpush1.msra.mxu0 0.0
        %721 = vmatprep.subr.mxu0 0.0
        %722 = vmatpush1.msra.mxu0 0.0
        %723 = vmatprep.subr.mxu0 0.0
        %724 = vmatpush1.msra.mxu0 0.0
        %725 = vmatprep.subr.mxu0 0.0
        %726 = vmatpush1.msra.mxu0 0.0
        %727 = vmatprep.subr.mxu0 0.0
        %728 = vmatpush1.msra.mxu0 0.0
        %729 = vmatprep.subr.mxu0 0.0
        %730 = vmatpush1.msra.mxu0 0.0
        %731 = vmatprep.subr.mxu0 0.0
        %732 = vmatpush1.msra.mxu0 0.0
        %733 = vmatprep.subr.mxu0 0.0
        %734 = vmatpush1.msra.mxu0 0.0
        %735 = vmatprep.subr.mxu0 0.0
        %736 = vmatpush1.msra.mxu0 0.0
        %737 = vmatprep.subr.mxu0 0.0
        %738 = vmatpush1.msra.mxu0 %v473
        %739 = vmatprep.subr.mxu0 0.0
        %740 = vmatpush1.msra.mxu0 %v472
        %741 = vmatprep.subr.mxu0 0.0
        %742 = vmatpush1.msra.mxu0 %v471
        %743 = vmatprep.subr.mxu0 0.0
        %744 = vmatpush1.msra.mxu0 %v470
        %745 = vmatprep.subr.mxu0 0.0
        %746 = vmatpush2.msra.mxu0 0.0
        %747 = vmatprep.subr.mxu0 0.0
        %748 = vmatpush2.msra.mxu0 0.0
        %749 = vmatprep.subr.mxu0 0.0
        %750 = vmatpush2.msra.mxu0 0.0
        %751 = vmatprep.subr.mxu0 0.0
        %752 = vmatpush2.msra.mxu0 0.0
        %753 = vmatprep.subr.mxu0 0.0
        %754 = vmatpush2.msra.mxu0 0.0
        %755 = vmatprep.subr.mxu0 0.0
        %756 = vmatpush2.msra.mxu0 0.0
        %757 = vmatprep.subr.mxu0 0.0
        %758 = vmatpush2.msra.mxu0 0.0
        %759 = vmatprep.subr.mxu0 0.0
        %760 = vmatpush2.msra.mxu0 0.0
        %761 = vmatprep.subr.mxu0 0.0
        %762 = vmatpush2.msra.mxu0 0.0
        %763 = vmatprep.subr.mxu0 0.0
        %764 = vmatpush2.msra.mxu0 0.0
        %765 = vmatprep.subr.mxu0 0.0
        %766 = vmatpush2.msra.mxu0 0.0
        %767 = vmatprep.subr.mxu0 0.0
        %768 = vmatpush2.msra.mxu0 0.0
        %769 = vmatprep.subr.mxu0 0.0
        %770 = vmatpush2.msra.mxu0 0.0
        %771 = vmatprep.subr.mxu0 0.0
        %772 = vmatpush2.msra.mxu0 0.0
        %773 = vmatprep.subr.mxu0 0.0
        %774 = vmatpush2.msra.mxu0 0.0
        %775 = vmatprep.subr.mxu0 0.0
        %776 = vmatpush2.msra.mxu0 0.0
        %777 = vmatprep.mubr.f32.mxu0 0.0
        %778 = vmatmul.mubr.f32.gmra.mxu0 %v711
        %v779 = vpop.f32.mrf.mxu0
        %v780 = vadd.f32 0.0, %v779
        %v781 = vpop.f32.mrf.mxu0
        %782 = vdwg.mxu0
        %v783 = vadd.f32 %v707, %v780
        %v784 = vxor.u32 %v783, 2147483648
        %v785 = vmul.f32 %v784, 1.442695
        %v786 = vpow.pop %v785
        %v787 = vadd.f32 %v786, 1.0
        %v788 = vrcp.pop %v787
        %v789 = vmul.f32 1.0, %v788
        %v790 = vtanh.pop %v783
        %v791 = vmul.f32 %v789, %v690
        %793 = vrot.lane.b32.xlu0 %v790, 64
        %v794 = vpop.permute.xlu0 %793
        %v796 = vmul.f32 %v789, %v794
        %798 = vrot.lane.b32.xlu0 %v796, 32
        %v799 = vpop.permute.xlu0 %798
        %v801 = vadd.f32 %v791, %v799
        %v802 = vtanh.pop %v801
        %804 = vrot.lane.b32.xlu0 %v802, 64
        %v805 = vpop.permute.xlu0 %804
        %v807 = vmul.f32 %v789, %v805
        %s808 = sadd.s32 %s475, 2
        %v809 = vstv %s808
        %vm810 = vcmp.eq.s32.totalorder %v582, %v809
        %v811 = vsel %vm810, 1, 0
        %812 = vset.pattern.permute.xlu0 0
        %813 = vperm.xlu0 %812, %v811
        %v814 = vpop.permute.xlu0 %813
        %vm815 = vcmp.eq.s32.totalorder %v814, 1
        %v816 = vsel %vm815, %v807, %v705
        %s817 = scalar_lea.vmem [#allocation6], 24
        %v818 = vld [vmem:[%s817] sm:$0xff]
        %820 = vrot.lane.b32.xlu0 %v807, 32
        %v821 = vpop.permute.xlu0 %820
        %v822 = vsel %vm368, %v821, 0
        %824 = vmatprep.subr.mxu0 0.0
        %825 = vmatpush1.msra.mxu0 0.0
        %826 = vmatprep.subr.mxu0 0.0
        %827 = vmatpush1.msra.mxu0 0.0
        %828 = vmatprep.subr.mxu0 0.0
        %829 = vmatpush1.msra.mxu0 0.0
        %830 = vmatprep.subr.mxu0 0.0
        %831 = vmatpush1.msra.mxu0 0.0
        %832 = vmatprep.subr.mxu0 0.0
        %833 = vmatpush1.msra.mxu0 0.0
        %834 = vmatprep.subr.mxu0 0.0
        %835 = vmatpush1.msra.mxu0 0.0
        %836 = vmatprep.subr.mxu0 0.0
        %837 = vmatpush1.msra.mxu0 0.0
        %838 = vmatprep.subr.mxu0 0.0
        %839 = vmatpush1.msra.mxu0 0.0
        %840 = vmatprep.subr.mxu0 0.0
        %841 = vmatpush1.msra.mxu0 0.0
        %842 = vmatprep.subr.mxu0 0.0
        %843 = vmatpush1.msra.mxu0 0.0
        %844 = vmatprep.subr.mxu0 0.0
        %845 = vmatpush1.msra.mxu0 0.0
        %846 = vmatprep.subr.mxu0 0.0
        %847 = vmatpush1.msra.mxu0 0.0
        %848 = vmatprep.subr.mxu0 0.0
        %849 = vmatpush1.msra.mxu0 %v473
        %850 = vmatprep.subr.mxu0 0.0
        %851 = vmatpush1.msra.mxu0 %v472
        %852 = vmatprep.subr.mxu0 0.0
        %853 = vmatpush1.msra.mxu0 %v471
        %854 = vmatprep.subr.mxu0 0.0
        %855 = vmatpush1.msra.mxu0 %v470
        %856 = vmatprep.subr.mxu0 0.0
        %857 = vmatpush2.msra.mxu0 0.0
        %858 = vmatprep.subr.mxu0 0.0
        %859 = vmatpush2.msra.mxu0 0.0
        %860 = vmatprep.subr.mxu0 0.0
        %861 = vmatpush2.msra.mxu0 0.0
        %862 = vmatprep.subr.mxu0 0.0
        %863 = vmatpush2.msra.mxu0 0.0
        %864 = vmatprep.subr.mxu0 0.0
        %865 = vmatpush2.msra.mxu0 0.0
        %866 = vmatprep.subr.mxu0 0.0
        %867 = vmatpush2.msra.mxu0 0.0
        %868 = vmatprep.subr.mxu0 0.0
        %869 = vmatpush2.msra.mxu0 0.0
        %870 = vmatprep.subr.mxu0 0.0
        %871 = vmatpush2.msra.mxu0 0.0
        %872 = vmatprep.subr.mxu0 0.0
        %873 = vmatpush2.msra.mxu0 0.0
        %874 = vmatprep.subr.mxu0 0.0
        %875 = vmatpush2.msra.mxu0 0.0
        %876 = vmatprep.subr.mxu0 0.0
        %877 = vmatpush2.msra.mxu0 0.0
        %878 = vmatprep.subr.mxu0 0.0
        %879 = vmatpush2.msra.mxu0 0.0
        %880 = vmatprep.subr.mxu0 0.0
        %881 = vmatpush2.msra.mxu0 0.0
        %882 = vmatprep.subr.mxu0 0.0
        %883 = vmatpush2.msra.mxu0 0.0
        %884 = vmatprep.subr.mxu0 0.0
        %885 = vmatpush2.msra.mxu0 0.0
        %886 = vmatprep.subr.mxu0 0.0
        %887 = vmatpush2.msra.mxu0 0.0
        %888 = vmatprep.mubr.f32.mxu0 0.0
        %889 = vmatmul.mubr.f32.gmra.mxu0 %v822
        %v890 = vpop.f32.mrf.mxu0
        %v891 = vadd.f32 0.0, %v890
        %v892 = vpop.f32.mrf.mxu0
        %893 = vdwg.mxu0
        %v894 = vadd.f32 %v818, %v891
        %v895 = vxor.u32 %v894, 2147483648
        %v896 = vmul.f32 %v895, 1.442695
        %v897 = vpow.pop %v896
        %v898 = vadd.f32 %v897, 1.0
        %v899 = vrcp.pop %v898
        %v900 = vmul.f32 1.0, %v899
        %v901 = vtanh.pop %v894
        %v902 = vmul.f32 %v900, %v801
        %904 = vrot.lane.b32.xlu0 %v901, 64
        %v905 = vpop.permute.xlu0 %904
        %v907 = vmul.f32 %v900, %v905
        %909 = vrot.lane.b32.xlu0 %v907, 32
        %v910 = vpop.permute.xlu0 %909
        %v912 = vadd.f32 %v902, %v910
        %v913 = vtanh.pop %v912
        %915 = vrot.lane.b32.xlu0 %v913, 64
        %v916 = vpop.permute.xlu0 %915
        %v918 = vmul.f32 %v900, %v916
        %s919 = sadd.s32 %s475, 3
        %v920 = vstv %s919
        %vm921 = vcmp.eq.s32.totalorder %v582, %v920
        %v922 = vsel %vm921, 1, 0
        %923 = vset.pattern.permute.xlu0 0
        %924 = vperm.xlu0 %923, %v922
        %v925 = vpop.permute.xlu0 %924
        %vm926 = vcmp.eq.s32.totalorder %v925, 1
        %v927 = vsel %vm926, %v918, %v816
        %929 = vrot.lane.b32.xlu0 %v918, 32
        %v930 = vpop.permute.xlu0 %929
        %932 = vst.msk [vmem:[#allocation7] sm:$0xff] %vm368, %v930
        %934 = vrot.lane.b32.xlu0 %v912, 96
        %v935 = vpop.permute.xlu0 %934
        %937 = vst.msk [vmem:[#allocation8] sm:$0xff] %vm368, %v935
        %939 = vrot.lane.b32.xlu0 %v927, 32
        %v940 = vpop.permute.xlu0 %939
        %942 = vst.msk [vmem:[#allocation9] sm:$0xff] %vm368, %v940
        %p943 = scmp.eq.s32.totalorder %s19, 1
        // Predicated region
        $region143: #{tpu_custom_call.1} parent=35 // pred_check
          %p944 = pneg %p943
        $region144: #{tpu_custom_call.1} parent=35 // pred_check_branch
          %946 = sbr.rel (%p944) target = $region146
        $region145: #{tpu_custom_call.1} parent=35 // pred_region
          %v947 = vld [vmem:[#allocation4] sm:$0xff]
          %v948 = vld [vmem:[#allocation4 + $0x8] sm:$0xff]
          %v949 = vld [vmem:[#allocation4 + $0x10] sm:$0xff]
          %v950 = vld [vmem:[#allocation4 + $0x18] sm:$0xff]
          %v951 = vld [vmem:[%s3] sm:$0x1]
          %v953 = vlaneseq
          %v954 = vshrl.u32 %v953, 7
          %v955 = vsub.s32 0, %v954
          %v956 = vrot.slane %v951, %v955
          %v958 = vsel %vm368, %v940, 0
          %960 = vmatprep.subr.mxu0 0.0
          %961 = vmatpush1.msra.mxu0 0.0
          %962 = vmatprep.subr.mxu0 0.0
          %963 = vmatpush1.msra.mxu0 0.0
          %964 = vmatprep.subr.mxu0 0.0
          %965 = vmatpush1.msra.mxu0 0.0
          %966 = vmatprep.subr.mxu0 0.0
          %967 = vmatpush1.msra.mxu0 0.0
          %968 = vmatprep.subr.mxu0 0.0
          %969 = vmatpush1.msra.mxu0 0.0
          %970 = vmatprep.subr.mxu0 0.0
          %971 = vmatpush1.msra.mxu0 0.0
          %972 = vmatprep.subr.mxu0 0.0
          %973 = vmatpush1.msra.mxu0 0.0
          %974 = vmatprep.subr.mxu0 0.0
          %975 = vmatpush1.msra.mxu0 0.0
          %976 = vmatprep.subr.mxu0 0.0
          %977 = vmatpush1.msra.mxu0 0.0
          %978 = vmatprep.subr.mxu0 0.0
          %979 = vmatpush1.msra.mxu0 0.0
          %980 = vmatprep.subr.mxu0 0.0
          %981 = vmatpush1.msra.mxu0 0.0
          %982 = vmatprep.subr.mxu0 0.0
          %983 = vmatpush1.msra.mxu0 0.0
          %984 = vmatprep.subr.mxu0 0.0
          %985 = vmatpush1.msra.mxu0 %v950
          %986 = vmatprep.subr.mxu0 0.0
          %987 = vmatpush1.msra.mxu0 %v949
          %988 = vmatprep.subr.mxu0 0.0
          %989 = vmatpush1.msra.mxu0 %v948
          %990 = vmatprep.subr.mxu0 0.0
          %991 = vmatpush1.msra.mxu0 %v947
          %992 = vmatprep.subr.mxu0 0.0
          %993 = vmatpush2.msra.mxu0 0.0
          %994 = vmatprep.subr.mxu0 0.0
          %995 = vmatpush2.msra.mxu0 0.0
          %996 = vmatprep.subr.mxu0 0.0
          %997 = vmatpush2.msra.mxu0 0.0
          %998 = vmatprep.subr.mxu0 0.0
          %999 = vmatpush2.msra.mxu0 0.0
          %1000 = vmatprep.subr.mxu0 0.0
          %1001 = vmatpush2.msra.mxu0 0.0
          %1002 = vmatprep.subr.mxu0 0.0
          %1003 = vmatpush2.msra.mxu0 0.0
          %1004 = vmatprep.subr.mxu0 0.0
          %1005 = vmatpush2.msra.mxu0 0.0
          %1006 = vmatprep.subr.mxu0 0.0
          %1007 = vmatpush2.msra.mxu0 0.0
          %1008 = vmatprep.subr.mxu0 0.0
          %1009 = vmatpush2.msra.mxu0 0.0
          %1010 = vmatprep.subr.mxu0 0.0
          %1011 = vmatpush2.msra.mxu0 0.0
          %1012 = vmatprep.subr.mxu0 0.0
          %1013 = vmatpush2.msra.mxu0 0.0
          %1014 = vmatprep.subr.mxu0 0.0
          %1015 = vmatpush2.msra.mxu0 0.0
          %1016 = vmatprep.subr.mxu0 0.0
          %1017 = vmatpush2.msra.mxu0 0.0
          %1018 = vmatprep.subr.mxu0 0.0
          %1019 = vmatpush2.msra.mxu0 0.0
          %1020 = vmatprep.subr.mxu0 0.0
          %1021 = vmatpush2.msra.mxu0 0.0
          %1022 = vmatprep.subr.mxu0 0.0
          %1023 = vmatpush2.msra.mxu0 0.0
          %1024 = vmatprep.mubr.f32.mxu0 0.0
          %1025 = vmatmul.mubr.f32.gmra.mxu0 %v958
          %v1026 = vpop.f32.mrf.mxu0
          %v1027 = vadd.f32 %v956, %v1026
          %v1028 = vpop.f32.mrf.mxu0
          %1029 = vdwg.mxu0
          %1030 = vst [vmem:[#allocation10] sm:$0xff] %v1027
        $region146: #{tpu_custom_call.1} parent=35 // pred_fallthru
          _
        // Predicated region
        $region147: #{tpu_custom_call.1} parent=35 // pred_check
          %p1031 = pneg %p121
        $region148: #{tpu_custom_call.1} parent=35 // pred_check_branch
          %1033 = sbr.rel (%p1031) target = $region150
        $region149: #{tpu_custom_call.1} parent=35 // pred_region
          %s1035 = ssub.s32 128, 128
          %1036 = vsyncadd [#allocation11], %s1035
          %s1038 = sshll.u32 [#allocation10], 4
          %s1039 = int_to_ptr.vmem [resolvable:$true] %s1038
          %1041 = dma.vmem_to_hbm [thread:$0]  %s1039, 128, %s7, [#allocation11]
        $region150: #{tpu_custom_call.1} parent=35 // pred_fallthru
          _
        // Predicated region
        $region151: #{tpu_custom_call.1} parent=35 // pred_check
          %p1042 = pneg %p121
        $region152: #{tpu_custom_call.1} parent=35 // pred_check_branch
          %1044 = sbr.rel (%p1042) target = $region154
        $region153: #{tpu_custom_call.1} parent=35 // pred_region
          %1045 = dma.done [#allocation11], 128
        $region154: #{tpu_custom_call.1} parent=35 // pred_fallthru
          _
      $region36: #{tpu_custom_call.1} parent=5 // pred_fallthru
        _
      %p1046 = scmp.le.s32.totalorder 2, %s14
      // Predicated region
      $region155: #{tpu_custom_call.1} parent=5 // pred_check
        %p1047 = pneg %p1046
      $region156: #{tpu_custom_call.1} parent=5 // pred_check_branch
        %1049 = sbr.rel (%p1047) target = $region158
      $region157: #{tpu_custom_call.1} parent=5 // pred_region
        %s1050 = ssub.s32 %s14, 2
      $region158: #{tpu_custom_call.1} parent=5 // pred_fallthru
        _
    $region6: #{tpu_custom_call.1} parent=1 // loop_footer
      %s18 = sadd.s32 1, %s14
    $region7: #{tpu_custom_call.1} parent=1 // loop_footer_branch
      %13 = sbr.rel target = $region3
    $region8: #{tpu_custom_call.1} parent=1 // loop_exit
      _
    %1051 = vsyncpa [#allocation11], 1
    %s1052 = scalar_lea.sflag [#allocation11], 1
    %1053 = vsyncpa %s1052, 1
  %1054 = vsyncmov [#allocation5]
  %s1055 = vpop.sfrf %1054
  %p1056 = scmp.eq.s32.totalorder %s1055, 0
  %p1057 = pneg %p1056
  %1059 = shalt.err (%p1057)
  %s1060 = scalar_lea.sflag [#allocation5], 1
  %1061 = vsyncmov %s1060
  %s1062 = vpop.sfrf %1061
  %p1063 = scmp.eq.s32.totalorder %s1062, 0
  %p1064 = pneg %p1063
  %1066 = shalt.err (%p1064)
  %s1067 = scalar_lea.sflag [#allocation5], 2
  %1068 = vsyncmov %s1067
  %s1069 = vpop.sfrf %1068
  %p1070 = scmp.eq.s32.totalorder %s1069, 0
  %p1071 = pneg %p1070
  %1073 = shalt.err (%p1071)

</llo_original>
